<compile_context>
chip_gen: v5e
topology: v5e:2x2
jax: 0.10.0
libtpu: 0.0.40
codegen_flags: <defaults>
</compile_context>

<pallas_src>
import functools

import jax
import jax.numpy as jnp
import numpy as np
from jax.experimental import pallas as pl
from jax.experimental.pallas import tpu as pltpu


# ----------------------------------------------------------------------------
# Pallas kernel: whole model in one invocation
# ----------------------------------------------------------------------------
def fused_lstm_fc_kernel(*refs, num_layers, seq_len, batch, hidden):
    """refs layout (L = num_layers):
      [0]          x:      (S*B, In)   time-major, flattened (row t*B + b)
      [1 + 3l]     W_ih^T: (In_l, 4H)  for layer l
      [2 + 3l]     W_hh^T: (H, 4H)
      [3 + 3l]     bias:   (1, 4H)     (= b_ih + b_hh)
      [1 + 3L]     W_fc^T: (H, O)
      [2 + 3L]     b_fc:   (1, O)
      [3 + 3L]     out:    (B, O)      output ref
      [4 + 3L]     seq:    (S*B, H)    VMEM scratch: current layer's hidden seq
      [5 + 3L]     gx:     (S*B, 4H)   VMEM scratch: batched input projections
    """
    S, B, H, L = seq_len, batch, hidden, num_layers
    x_ref = refs[0]
    wih_refs = [refs[1 + 3 * l] for l in range(L)]
    whh_refs = [refs[2 + 3 * l] for l in range(L)]
    b_refs = [refs[3 + 3 * l] for l in range(L)]
    wfc_ref = refs[1 + 3 * L]
    bfc_ref = refs[2 + 3 * L]
    out_ref = refs[3 + 3 * L]
    seq_ref = refs[4 + 3 * L]
    gx_ref = refs[5 + 3 * L]

    h = None
    for l in range(L):
        # ---- batched input projection for ALL timesteps (off the serial path)
        inp = x_ref[...] if l == 0 else seq_ref[...]          # (S*B, In_l)
        gx_ref[...] = (jnp.dot(inp, wih_refs[l][...],
                               preferred_element_type=jnp.float32)
                       + b_refs[l][...])                       # (S*B, 4H)

        # ---- serial recurrence: only h @ W_hh^T remains per step
        w_hh = whh_refs[l][...]                                # (H, 4H), hoisted
        h = jnp.zeros((B, H), jnp.float32)
        c = jnp.zeros((B, H), jnp.float32)
        for t in range(S):                                     # static unroll (S small)
            gates = (gx_ref[pl.ds(t * B, B), :]
                     + jnp.dot(h, w_hh, preferred_element_type=jnp.float32))
            # dense activations over the full (B, 4H) vreg, slice only to combine
            sig = jax.nn.sigmoid(gates)
            tnh = jnp.tanh(gates)
            i_g = sig[:, 0 * H:1 * H]
            f_g = sig[:, 1 * H:2 * H]
            g_g = tnh[:, 2 * H:3 * H]
            o_g = sig[:, 3 * H:4 * H]
            c = f_g * c + i_g * g_g
            h = o_g * jnp.tanh(c)
            if l < L - 1:              # last layer: only h at t = S-1 is consumed
                seq_ref[pl.ds(t * B, B), :] = h

    # ---- FC head on the top layer's final hidden state (the only HBM write)
    out_ref[...] = (jnp.dot(h, wfc_ref[...], preferred_element_type=jnp.float32)
                    + bfc_ref[...])


# ----------------------------------------------------------------------------
# Wrapper
# ----------------------------------------------------------------------------
def lstm_model_forward(x, params, num_layers):
    """Equivalent of LSTM.forward(x); x: (B, S, input_dim), batch_first."""
    B, S, In = x.shape
    w_fc, b_fc = params["fc"]
    O = w_fc.shape[0]
    H = params["lstm_l0"][1].shape[1]                         # w_hh: (4H, H)

    # Time-major, flattened: row t*B + b holds (timestep t, batch b).
    x2d = jnp.transpose(x, (1, 0, 2)).reshape(S * B, In).astype(jnp.float32)

    flat = [x2d]
    for l in range(num_layers):
        w_ih, w_hh, b_ih, b_hh = params[f"lstm_l{l}"]
        flat += [
            jnp.transpose(w_ih),                              # (In_l, 4H)
            jnp.transpose(w_hh),                              # (H, 4H)
            (b_ih + b_hh).reshape(1, 4 * H),                  # (1, 4H)
        ]
    flat += [jnp.transpose(w_fc), b_fc.reshape(1, O)]         # (H, O), (1, O)

    kernel = functools.partial(fused_lstm_fc_kernel,
                               num_layers=num_layers, seq_len=S,
                               batch=B, hidden=H)
    vmem = pl.BlockSpec(memory_space=pltpu.MemorySpace.VMEM)
    return pl.pallas_call(
        kernel,
        out_shape=jax.ShapeDtypeStruct((B, O), jnp.float32),
        in_specs=[vmem] * len(flat),
        out_specs=vmem,
        scratch_shapes=[
            pltpu.VMEM((S * B, H), jnp.float32),              # layer hidden sequence
            pltpu.VMEM((S * B, 4 * H), jnp.float32),          # batched input projections
        ],
    )(*flat)


# ----------------------------------------------------------------------------
# Pure-JAX reference (for correctness check)
# ----------------------------------------------------------------------------
def lstm_model_reference(x, params, num_layers, hidden_dim):
    B, S, _ = x.shape
    seq = x.astype(jnp.float32)
    for l in range(num_layers):
        w_ih, w_hh, b_ih, b_hh = params[f"lstm_l{l}"]
        h = jnp.zeros((B, hidden_dim), jnp.float32)
        c = jnp.zeros((B, hidden_dim), jnp.float32)
        outs = []
        for t in range(S):
            gates = seq[:, t, :] @ w_ih.T + b_ih + h @ w_hh.T + b_hh
            i, f, g, o = jnp.split(gates, 4, axis=-1)
            i, f, o = jax.nn.sigmoid(i), jax.nn.sigmoid(f), jax.nn.sigmoid(o)
            g = jnp.tanh(g)
            c = f * c + i * g
            h = o * jnp.tanh(c)
            outs.append(h)
        seq = jnp.stack(outs, axis=1)
    w_fc, b_fc = params["fc"]
    return seq[:, -1, :] @ w_fc.T + b_fc


# ----------------------------------------------------------------------------
# Deterministic parameter init (PyTorch-style U(-1/sqrt(H), 1/sqrt(H)))
# ----------------------------------------------------------------------------
def init_params(key, input_dim, hidden_dim, num_layers, output_dim):
    params = {}
    k = 1.0 / np.sqrt(hidden_dim)
    for l in range(num_layers):
        in_dim = input_dim if l == 0 else hidden_dim
        key, k1, k2, k3, k4 = jax.random.split(key, 5)
        params[f"lstm_l{l}"] = (
            jax.random.uniform(k1, (4 * hidden_dim, in_dim), jnp.float32, -k, k),
            jax.random.uniform(k2, (4 * hidden_dim, hidden_dim), jnp.float32, -k, k),
            jax.random.uniform(k3, (4 * hidden_dim,), jnp.float32, -k, k),
            jax.random.uniform(k4, (4 * hidden_dim,), jnp.float32, -k, k),
        )
    key, k1, k2 = jax.random.split(key, 3)
    params["fc"] = (
        jax.random.uniform(k1, (output_dim, hidden_dim), jnp.float32, -k, k),
        jax.random.uniform(k2, (output_dim,), jnp.float32, -k, k),
    )
    return params


if __name__ == "__main__":
    batch, seq, input_dim = 2, 8, 4
    hidden_dim, num_layers, output_dim = 32, 2, 4

    key = jax.random.PRNGKey(0)
    key, pkey, xkey = jax.random.split(key, 3)
    params = init_params(pkey, input_dim, hidden_dim, num_layers, output_dim)
    x = jax.random.normal(xkey, (batch, seq, input_dim), jnp.float32)

    fwd = jax.jit(functools.partial(lstm_model_forward, num_layers=num_layers))
    out = jax.block_until_ready(fwd(x, params))
    assert out.shape == (batch, output_dim)

    ref = lstm_model_reference(x, params, num_layers, hidden_dim)
    np.testing.assert_allclose(np.asarray(out), np.asarray(ref), rtol=1e-4, atol=1e-4)

    print("KERNEL_OK")
</pallas_src>

<mosaic_0001>
module attributes {stable_mosaic.version = 11 : i64} {
  func.func @fused_lstm_fc_kernel(%arg0: memref<16x4xf32, #tpu.memory_space<vmem>>, %arg1: memref<4x128xf32, #tpu.memory_space<vmem>>, %arg2: memref<32x128xf32, #tpu.memory_space<vmem>>, %arg3: memref<1x128xf32, #tpu.memory_space<vmem>>, %arg4: memref<32x128xf32, #tpu.memory_space<vmem>>, %arg5: memref<32x128xf32, #tpu.memory_space<vmem>>, %arg6: memref<1x128xf32, #tpu.memory_space<vmem>>, %arg7: memref<32x4xf32, #tpu.memory_space<vmem>>, %arg8: memref<1x4xf32, #tpu.memory_space<vmem>>, %arg9: memref<2x4xf32, #tpu.memory_space<vmem>>, %arg10: memref<16x32xf32, #tpu.memory_space<vmem>>, %arg11: memref<16x128xf32, #tpu.memory_space<vmem>>) attributes {dimension_semantics = [], scalar_prefetch = 0 : i64, scratch_operands = 2 : i64, tpu.core_type = #tpu.core_type<tc>} {
    %c0 = arith.constant 0 : index
    %c0_0 = arith.constant 0 : index
    %0 = vector.load %arg0[%c0, %c0_0] : memref<16x4xf32, #tpu.memory_space<vmem>>, vector<16x4xf32>
    %c0_1 = arith.constant 0 : index
    %c0_2 = arith.constant 0 : index
    %1 = vector.load %arg1[%c0_1, %c0_2] : memref<4x128xf32, #tpu.memory_space<vmem>>, vector<4x128xf32>
    %cst = arith.constant dense<0.000000e+00> : vector<16x128xf32>
    %2 = tpu.matmul %0, %1, %cst {dimension_numbers = #tpu.dot_dimension_numbers<[1], [0], [0], [1], [0, 0, 1, 1], [], []>} : vector<16x4xf32>, vector<4x128xf32>, vector<16x128xf32> -> vector<16x128xf32>
    %c0_3 = arith.constant 0 : index
    %c0_4 = arith.constant 0 : index
    %3 = vector.load %arg3[%c0_3, %c0_4] : memref<1x128xf32, #tpu.memory_space<vmem>>, vector<1x128xf32>
    %4 = vector.broadcast %3 : vector<1x128xf32> to vector<16x128xf32>
    %5 = arith.addf %2, %4 : vector<16x128xf32>
    %c0_5 = arith.constant 0 : index
    %c0_6 = arith.constant 0 : index
    %6 = vector.load %arg11[%c0_5, %c0_6] : memref<16x128xf32, #tpu.memory_space<vmem>>, vector<16x128xf32>
    tpu.vector_store %arg11[%c0_5, %c0_6], %5 {strides = array<i32>} : memref<16x128xf32, #tpu.memory_space<vmem>>, vector<16x128xf32>,
    %c0_7 = arith.constant 0 : index
    %c0_8 = arith.constant 0 : index
    %7 = vector.load %arg2[%c0_7, %c0_8] : memref<32x128xf32, #tpu.memory_space<vmem>>, vector<32x128xf32>
    %cst_9 = arith.constant 0.000000e+00 : f32
    %8 = vector.broadcast %cst_9 : f32 to vector<2x32xf32>
    %cst_10 = arith.constant 0.000000e+00 : f32
    %9 = vector.broadcast %cst_10 : f32 to vector<2x32xf32>
    %c0_11 = arith.constant 0 : index
    %c0_12 = arith.constant 0 : index
    %10 = vector.load %arg11[%c0_11, %c0_12] : memref<16x128xf32, #tpu.memory_space<vmem>>, vector<2x128xf32>
    %cst_13 = arith.constant dense<0.000000e+00> : vector<2x128xf32>
    %11 = tpu.matmul %8, %7, %cst_13 {dimension_numbers = #tpu.dot_dimension_numbers<[1], [0], [0], [1], [0, 0, 1, 1], [], []>} : vector<2x32xf32>, vector<32x128xf32>, vector<2x128xf32> -> vector<2x128xf32>
    %12 = arith.addf %10, %11 : vector<2x128xf32>
    %13 = arith.negf %12 : vector<2x128xf32>
    %14 = math.exp %13 : vector<2x128xf32>
    %cst_14 = arith.constant 1.000000e+00 : f32
    %15 = vector.broadcast %cst_14 : f32 to vector<2x128xf32>
    %16 = arith.addf %15, %14 : vector<2x128xf32>
    %17 = arith.divf %15, %16 : vector<2x128xf32>
    %18 = math.tanh %12 : vector<2x128xf32>
    %19 = vector.extract_strided_slice %17 {offsets = [0, 0], sizes = [2, 32], strides = [1, 1]} : vector<2x128xf32> to vector<2x32xf32>
    %20 = vector.extract_strided_slice %17 {offsets = [0, 32], sizes = [2, 32], strides = [1, 1]} : vector<2x128xf32> to vector<2x32xf32>
    %21 = vector.extract_strided_slice %18 {offsets = [0, 64], sizes = [2, 32], strides = [1, 1]} : vector<2x128xf32> to vector<2x32xf32>
    %22 = vector.extract_strided_slice %17 {offsets = [0, 96], sizes = [2, 32], strides = [1, 1]} : vector<2x128xf32> to vector<2x32xf32>
    %23 = arith.mulf %20, %9 : vector<2x32xf32>
    %24 = arith.mulf %19, %21 : vector<2x32xf32>
    %25 = arith.addf %23, %24 : vector<2x32xf32>
    %26 = math.tanh %25 : vector<2x32xf32>
    %27 = arith.mulf %22, %26 : vector<2x32xf32>
    %c0_15 = arith.constant 0 : index
    %c0_16 = arith.constant 0 : index
    %28 = vector.load %arg10[%c0_15, %c0_16] : memref<16x32xf32, #tpu.memory_space<vmem>>, vector<2x32xf32>
    tpu.vector_store %arg10[%c0_15, %c0_16], %27 {strides = array<i32>} : memref<16x32xf32, #tpu.memory_space<vmem>>, vector<2x32xf32>,
    %c2 = arith.constant 2 : index
    %c0_17 = arith.constant 0 : index
    %29 = vector.load %arg11[%c2, %c0_17] : memref<16x128xf32, #tpu.memory_space<vmem>>, vector<2x128xf32>
    %cst_18 = arith.constant dense<0.000000e+00> : vector<2x128xf32>
    %30 = tpu.matmul %27, %7, %cst_18 {dimension_numbers = #tpu.dot_dimension_numbers<[1], [0], [0], [1], [0, 0, 1, 1], [], []>} : vector<2x32xf32>, vector<32x128xf32>, vector<2x128xf32> -> vector<2x128xf32>
    %31 = arith.addf %29, %30 : vector<2x128xf32>
    %32 = arith.negf %31 : vector<2x128xf32>
    %33 = math.exp %32 : vector<2x128xf32>
    %cst_19 = arith.constant 1.000000e+00 : f32
    %34 = vector.broadcast %cst_19 : f32 to vector<2x128xf32>
    %35 = arith.addf %34, %33 : vector<2x128xf32>
    %36 = arith.divf %34, %35 : vector<2x128xf32>
    %37 = math.tanh %31 : vector<2x128xf32>
    %38 = vector.extract_strided_slice %36 {offsets = [0, 0], sizes = [2, 32], strides = [1, 1]} : vector<2x128xf32> to vector<2x32xf32>
    %39 = vector.extract_strided_slice %36 {offsets = [0, 32], sizes = [2, 32], strides = [1, 1]} : vector<2x128xf32> to vector<2x32xf32>
    %40 = vector.extract_strided_slice %37 {offsets = [0, 64], sizes = [2, 32], strides = [1, 1]} : vector<2x128xf32> to vector<2x32xf32>
    %41 = vector.extract_strided_slice %36 {offsets = [0, 96], sizes = [2, 32], strides = [1, 1]} : vector<2x128xf32> to vector<2x32xf32>
    %42 = arith.mulf %39, %25 : vector<2x32xf32>
    %43 = arith.mulf %38, %40 : vector<2x32xf32>
    %44 = arith.addf %42, %43 : vector<2x32xf32>
    %45 = math.tanh %44 : vector<2x32xf32>
    %46 = arith.mulf %41, %45 : vector<2x32xf32>
    %c2_20 = arith.constant 2 : index
    %c0_21 = arith.constant 0 : index
    %47 = vector.load %arg10[%c2_20, %c0_21] : memref<16x32xf32, #tpu.memory_space<vmem>>, vector<2x32xf32>
    tpu.vector_store %arg10[%c2_20, %c0_21], %46 {strides = array<i32>} : memref<16x32xf32, #tpu.memory_space<vmem>>, vector<2x32xf32>,
    %c4 = arith.constant 4 : index
    %c0_22 = arith.constant 0 : index
    %48 = vector.load %arg11[%c4, %c0_22] : memref<16x128xf32, #tpu.memory_space<vmem>>, vector<2x128xf32>
    %cst_23 = arith.constant dense<0.000000e+00> : vector<2x128xf32>
    %49 = tpu.matmul %46, %7, %cst_23 {dimension_numbers = #tpu.dot_dimension_numbers<[1], [0], [0], [1], [0, 0, 1, 1], [], []>} : vector<2x32xf32>, vector<32x128xf32>, vector<2x128xf32> -> vector<2x128xf32>
    %50 = arith.addf %48, %49 : vector<2x128xf32>
    %51 = arith.negf %50 : vector<2x128xf32>
    %52 = math.exp %51 : vector<2x128xf32>
    %cst_24 = arith.constant 1.000000e+00 : f32
    %53 = vector.broadcast %cst_24 : f32 to vector<2x128xf32>
    %54 = arith.addf %53, %52 : vector<2x128xf32>
    %55 = arith.divf %53, %54 : vector<2x128xf32>
    %56 = math.tanh %50 : vector<2x128xf32>
    %57 = vector.extract_strided_slice %55 {offsets = [0, 0], sizes = [2, 32], strides = [1, 1]} : vector<2x128xf32> to vector<2x32xf32>
    %58 = vector.extract_strided_slice %55 {offsets = [0, 32], sizes = [2, 32], strides = [1, 1]} : vector<2x128xf32> to vector<2x32xf32>
    %59 = vector.extract_strided_slice %56 {offsets = [0, 64], sizes = [2, 32], strides = [1, 1]} : vector<2x128xf32> to vector<2x32xf32>
    %60 = vector.extract_strided_slice %55 {offsets = [0, 96], sizes = [2, 32], strides = [1, 1]} : vector<2x128xf32> to vector<2x32xf32>
    %61 = arith.mulf %58, %44 : vector<2x32xf32>
    %62 = arith.mulf %57, %59 : vector<2x32xf32>
    %63 = arith.addf %61, %62 : vector<2x32xf32>
    %64 = math.tanh %63 : vector<2x32xf32>
    %65 = arith.mulf %60, %64 : vector<2x32xf32>
    %c4_25 = arith.constant 4 : index
    %c0_26 = arith.constant 0 : index
    %66 = vector.load %arg10[%c4_25, %c0_26] : memref<16x32xf32, #tpu.memory_space<vmem>>, vector<2x32xf32>
    tpu.vector_store %arg10[%c4_25, %c0_26], %65 {strides = array<i32>} : memref<16x32xf32, #tpu.memory_space<vmem>>, vector<2x32xf32>,
    %c6 = arith.constant 6 : index
    %c0_27 = arith.constant 0 : index
    %67 = vector.load %arg11[%c6, %c0_27] : memref<16x128xf32, #tpu.memory_space<vmem>>, vector<2x128xf32>
    %cst_28 = arith.constant dense<0.000000e+00> : vector<2x128xf32>
    %68 = tpu.matmul %65, %7, %cst_28 {dimension_numbers = #tpu.dot_dimension_numbers<[1], [0], [0], [1], [0, 0, 1, 1], [], []>} : vector<2x32xf32>, vector<32x128xf32>, vector<2x128xf32> -> vector<2x128xf32>
    %69 = arith.addf %67, %68 : vector<2x128xf32>
    %70 = arith.negf %69 : vector<2x128xf32>
    %71 = math.exp %70 : vector<2x128xf32>
    %cst_29 = arith.constant 1.000000e+00 : f32
    %72 = vector.broadcast %cst_29 : f32 to vector<2x128xf32>
    %73 = arith.addf %72, %71 : vector<2x128xf32>
    %74 = arith.divf %72, %73 : vector<2x128xf32>
    %75 = math.tanh %69 : vector<2x128xf32>
    %76 = vector.extract_strided_slice %74 {offsets = [0, 0], sizes = [2, 32], strides = [1, 1]} : vector<2x128xf32> to vector<2x32xf32>
    %77 = vector.extract_strided_slice %74 {offsets = [0, 32], sizes = [2, 32], strides = [1, 1]} : vector<2x128xf32> to vector<2x32xf32>
    %78 = vector.extract_strided_slice %75 {offsets = [0, 64], sizes = [2, 32], strides = [1, 1]} : vector<2x128xf32> to vector<2x32xf32>
    %79 = vector.extract_strided_slice %74 {offsets = [0, 96], sizes = [2, 32], strides = [1, 1]} : vector<2x128xf32> to vector<2x32xf32>
    %80 = arith.mulf %77, %63 : vector<2x32xf32>
    %81 = arith.mulf %76, %78 : vector<2x32xf32>
    %82 = arith.addf %80, %81 : vector<2x32xf32>
    %83 = math.tanh %82 : vector<2x32xf32>
    %84 = arith.mulf %79, %83 : vector<2x32xf32>
    %c6_30 = arith.constant 6 : index
    %c0_31 = arith.constant 0 : index
    %85 = vector.load %arg10[%c6_30, %c0_31] : memref<16x32xf32, #tpu.memory_space<vmem>>, vector<2x32xf32>
    tpu.vector_store %arg10[%c6_30, %c0_31], %84 {strides = array<i32>} : memref<16x32xf32, #tpu.memory_space<vmem>>, vector<2x32xf32>,
    %c8 = arith.constant 8 : index
    %c0_32 = arith.constant 0 : index
    %86 = vector.load %arg11[%c8, %c0_32] : memref<16x128xf32, #tpu.memory_space<vmem>>, vector<2x128xf32>
    %cst_33 = arith.constant dense<0.000000e+00> : vector<2x128xf32>
    %87 = tpu.matmul %84, %7, %cst_33 {dimension_numbers = #tpu.dot_dimension_numbers<[1], [0], [0], [1], [0, 0, 1, 1], [], []>} : vector<2x32xf32>, vector<32x128xf32>, vector<2x128xf32> -> vector<2x128xf32>
    %88 = arith.addf %86, %87 : vector<2x128xf32>
    %89 = arith.negf %88 : vector<2x128xf32>
    %90 = math.exp %89 : vector<2x128xf32>
    %cst_34 = arith.constant 1.000000e+00 : f32
    %91 = vector.broadcast %cst_34 : f32 to vector<2x128xf32>
    %92 = arith.addf %91, %90 : vector<2x128xf32>
    %93 = arith.divf %91, %92 : vector<2x128xf32>
    %94 = math.tanh %88 : vector<2x128xf32>
    %95 = vector.extract_strided_slice %93 {offsets = [0, 0], sizes = [2, 32], strides = [1, 1]} : vector<2x128xf32> to vector<2x32xf32>
    %96 = vector.extract_strided_slice %93 {offsets = [0, 32], sizes = [2, 32], strides = [1, 1]} : vector<2x128xf32> to vector<2x32xf32>
    %97 = vector.extract_strided_slice %94 {offsets = [0, 64], sizes = [2, 32], strides = [1, 1]} : vector<2x128xf32> to vector<2x32xf32>
    %98 = vector.extract_strided_slice %93 {offsets = [0, 96], sizes = [2, 32], strides = [1, 1]} : vector<2x128xf32> to vector<2x32xf32>
    %99 = arith.mulf %96, %82 : vector<2x32xf32>
    %100 = arith.mulf %95, %97 : vector<2x32xf32>
    %101 = arith.addf %99, %100 : vector<2x32xf32>
    %102 = math.tanh %101 : vector<2x32xf32>
    %103 = arith.mulf %98, %102 : vector<2x32xf32>
    %c8_35 = arith.constant 8 : index
    %c0_36 = arith.constant 0 : index
    %104 = vector.load %arg10[%c8_35, %c0_36] : memref<16x32xf32, #tpu.memory_space<vmem>>, vector<2x32xf32>
    tpu.vector_store %arg10[%c8_35, %c0_36], %103 {strides = array<i32>} : memref<16x32xf32, #tpu.memory_space<vmem>>, vector<2x32xf32>,
    %c10 = arith.constant 10 : index
    %c0_37 = arith.constant 0 : index
    %105 = vector.load %arg11[%c10, %c0_37] : memref<16x128xf32, #tpu.memory_space<vmem>>, vector<2x128xf32>
    %cst_38 = arith.constant dense<0.000000e+00> : vector<2x128xf32>
    %106 = tpu.matmul %103, %7, %cst_38 {dimension_numbers = #tpu.dot_dimension_numbers<[1], [0], [0], [1], [0, 0, 1, 1], [], []>} : vector<2x32xf32>, vector<32x128xf32>, vector<2x128xf32> -> vector<2x128xf32>
    %107 = arith.addf %105, %106 : vector<2x128xf32>
    %108 = arith.negf %107 : vector<2x128xf32>
    %109 = math.exp %108 : vector<2x128xf32>
    %cst_39 = arith.constant 1.000000e+00 : f32
    %110 = vector.broadcast %cst_39 : f32 to vector<2x128xf32>
    %111 = arith.addf %110, %109 : vector<2x128xf32>
    %112 = arith.divf %110, %111 : vector<2x128xf32>
    %113 = math.tanh %107 : vector<2x128xf32>
    %114 = vector.extract_strided_slice %112 {offsets = [0, 0], sizes = [2, 32], strides = [1, 1]} : vector<2x128xf32> to vector<2x32xf32>
    %115 = vector.extract_strided_slice %112 {offsets = [0, 32], sizes = [2, 32], strides = [1, 1]} : vector<2x128xf32> to vector<2x32xf32>
    %116 = vector.extract_strided_slice %113 {offsets = [0, 64], sizes = [2, 32], strides = [1, 1]} : vector<2x128xf32> to vector<2x32xf32>
    %117 = vector.extract_strided_slice %112 {offsets = [0, 96], sizes = [2, 32], strides = [1, 1]} : vector<2x128xf32> to vector<2x32xf32>
    %118 = arith.mulf %115, %101 : vector<2x32xf32>
    %119 = arith.mulf %114, %116 : vector<2x32xf32>
    %120 = arith.addf %118, %119 : vector<2x32xf32>
    %121 = math.tanh %120 : vector<2x32xf32>
    %122 = arith.mulf %117, %121 : vector<2x32xf32>
    %c10_40 = arith.constant 10 : index
    %c0_41 = arith.constant 0 : index
    %123 = vector.load %arg10[%c10_40, %c0_41] : memref<16x32xf32, #tpu.memory_space<vmem>>, vector<2x32xf32>
    tpu.vector_store %arg10[%c10_40, %c0_41], %122 {strides = array<i32>} : memref<16x32xf32, #tpu.memory_space<vmem>>, vector<2x32xf32>,
    %c12 = arith.constant 12 : index
    %c0_42 = arith.constant 0 : index
    %124 = vector.load %arg11[%c12, %c0_42] : memref<16x128xf32, #tpu.memory_space<vmem>>, vector<2x128xf32>
    %cst_43 = arith.constant dense<0.000000e+00> : vector<2x128xf32>
    %125 = tpu.matmul %122, %7, %cst_43 {dimension_numbers = #tpu.dot_dimension_numbers<[1], [0], [0], [1], [0, 0, 1, 1], [], []>} : vector<2x32xf32>, vector<32x128xf32>, vector<2x128xf32> -> vector<2x128xf32>
    %126 = arith.addf %124, %125 : vector<2x128xf32>
    %127 = arith.negf %126 : vector<2x128xf32>
    %128 = math.exp %127 : vector<2x128xf32>
    %cst_44 = arith.constant 1.000000e+00 : f32
    %129 = vector.broadcast %cst_44 : f32 to vector<2x128xf32>
    %130 = arith.addf %129, %128 : vector<2x128xf32>
    %131 = arith.divf %129, %130 : vector<2x128xf32>
    %132 = math.tanh %126 : vector<2x128xf32>
    %133 = vector.extract_strided_slice %131 {offsets = [0, 0], sizes = [2, 32], strides = [1, 1]} : vector<2x128xf32> to vector<2x32xf32>
    %134 = vector.extract_strided_slice %131 {offsets = [0, 32], sizes = [2, 32], strides = [1, 1]} : vector<2x128xf32> to vector<2x32xf32>
    %135 = vector.extract_strided_slice %132 {offsets = [0, 64], sizes = [2, 32], strides = [1, 1]} : vector<2x128xf32> to vector<2x32xf32>
    %136 = vector.extract_strided_slice %131 {offsets = [0, 96], sizes = [2, 32], strides = [1, 1]} : vector<2x128xf32> to vector<2x32xf32>
    %137 = arith.mulf %134, %120 : vector<2x32xf32>
    %138 = arith.mulf %133, %135 : vector<2x32xf32>
    %139 = arith.addf %137, %138 : vector<2x32xf32>
    %140 = math.tanh %139 : vector<2x32xf32>
    %141 = arith.mulf %136, %140 : vector<2x32xf32>
    %c12_45 = arith.constant 12 : index
    %c0_46 = arith.constant 0 : index
    %142 = vector.load %arg10[%c12_45, %c0_46] : memref<16x32xf32, #tpu.memory_space<vmem>>, vector<2x32xf32>
    tpu.vector_store %arg10[%c12_45, %c0_46], %141 {strides = array<i32>} : memref<16x32xf32, #tpu.memory_space<vmem>>, vector<2x32xf32>,
    %c14 = arith.constant 14 : index
    %c0_47 = arith.constant 0 : index
    %143 = vector.load %arg11[%c14, %c0_47] : memref<16x128xf32, #tpu.memory_space<vmem>>, vector<2x128xf32>
    %cst_48 = arith.constant dense<0.000000e+00> : vector<2x128xf32>
    %144 = tpu.matmul %141, %7, %cst_48 {dimension_numbers = #tpu.dot_dimension_numbers<[1], [0], [0], [1], [0, 0, 1, 1], [], []>} : vector<2x32xf32>, vector<32x128xf32>, vector<2x128xf32> -> vector<2x128xf32>
    %145 = arith.addf %143, %144 : vector<2x128xf32>
    %146 = arith.negf %145 : vector<2x128xf32>
    %147 = math.exp %146 : vector<2x128xf32>
    %cst_49 = arith.constant 1.000000e+00 : f32
    %148 = vector.broadcast %cst_49 : f32 to vector<2x128xf32>
    %149 = arith.addf %148, %147 : vector<2x128xf32>
    %150 = arith.divf %148, %149 : vector<2x128xf32>
    %151 = math.tanh %145 : vector<2x128xf32>
    %152 = vector.extract_strided_slice %150 {offsets = [0, 0], sizes = [2, 32], strides = [1, 1]} : vector<2x128xf32> to vector<2x32xf32>
    %153 = vector.extract_strided_slice %150 {offsets = [0, 32], sizes = [2, 32], strides = [1, 1]} : vector<2x128xf32> to vector<2x32xf32>
    %154 = vector.extract_strided_slice %151 {offsets = [0, 64], sizes = [2, 32], strides = [1, 1]} : vector<2x128xf32> to vector<2x32xf32>
    %155 = vector.extract_strided_slice %150 {offsets = [0, 96], sizes = [2, 32], strides = [1, 1]} : vector<2x128xf32> to vector<2x32xf32>
    %156 = arith.mulf %153, %139 : vector<2x32xf32>
    %157 = arith.mulf %152, %154 : vector<2x32xf32>
    %158 = arith.addf %156, %157 : vector<2x32xf32>
    %159 = math.tanh %158 : vector<2x32xf32>
    %160 = arith.mulf %155, %159 : vector<2x32xf32>
    %c14_50 = arith.constant 14 : index
    %c0_51 = arith.constant 0 : index
    %161 = vector.load %arg10[%c14_50, %c0_51] : memref<16x32xf32, #tpu.memory_space<vmem>>, vector<2x32xf32>
    tpu.vector_store %arg10[%c14_50, %c0_51], %160 {strides = array<i32>} : memref<16x32xf32, #tpu.memory_space<vmem>>, vector<2x32xf32>,
    %c0_52 = arith.constant 0 : index
    %c0_53 = arith.constant 0 : index
    %162 = vector.load %arg10[%c0_52, %c0_53] : memref<16x32xf32, #tpu.memory_space<vmem>>, vector<16x32xf32>
    %c0_54 = arith.constant 0 : index
    %c0_55 = arith.constant 0 : index
    %163 = vector.load %arg4[%c0_54, %c0_55] : memref<32x128xf32, #tpu.memory_space<vmem>>, vector<32x128xf32>
    %cst_56 = arith.constant dense<0.000000e+00> : vector<16x128xf32>
    %164 = tpu.matmul %162, %163, %cst_56 {dimension_numbers = #tpu.dot_dimension_numbers<[1], [0], [0], [1], [0, 0, 1, 1], [], []>} : vector<16x32xf32>, vector<32x128xf32>, vector<16x128xf32> -> vector<16x128xf32>
    %c0_57 = arith.constant 0 : index
    %c0_58 = arith.constant 0 : index
    %165 = vector.load %arg6[%c0_57, %c0_58] : memref<1x128xf32, #tpu.memory_space<vmem>>, vector<1x128xf32>
    %166 = vector.broadcast %165 : vector<1x128xf32> to vector<16x128xf32>
    %167 = arith.addf %164, %166 : vector<16x128xf32>
    %c0_59 = arith.constant 0 : index
    %c0_60 = arith.constant 0 : index
    %168 = vector.load %arg11[%c0_59, %c0_60] : memref<16x128xf32, #tpu.memory_space<vmem>>, vector<16x128xf32>
    tpu.vector_store %arg11[%c0_59, %c0_60], %167 {strides = array<i32>} : memref<16x128xf32, #tpu.memory_space<vmem>>, vector<16x128xf32>,
    %c0_61 = arith.constant 0 : index
    %c0_62 = arith.constant 0 : index
    %169 = vector.load %arg5[%c0_61, %c0_62] : memref<32x128xf32, #tpu.memory_space<vmem>>, vector<32x128xf32>
    %cst_63 = arith.constant 0.000000e+00 : f32
    %170 = vector.broadcast %cst_63 : f32 to vector<2x32xf32>
    %cst_64 = arith.constant 0.000000e+00 : f32
    %171 = vector.broadcast %cst_64 : f32 to vector<2x32xf32>
    %c0_65 = arith.constant 0 : index
    %c0_66 = arith.constant 0 : index
    %172 = vector.load %arg11[%c0_65, %c0_66] : memref<16x128xf32, #tpu.memory_space<vmem>>, vector<2x128xf32>
    %cst_67 = arith.constant dense<0.000000e+00> : vector<2x128xf32>
    %173 = tpu.matmul %170, %169, %cst_67 {dimension_numbers = #tpu.dot_dimension_numbers<[1], [0], [0], [1], [0, 0, 1, 1], [], []>} : vector<2x32xf32>, vector<32x128xf32>, vector<2x128xf32> -> vector<2x128xf32>
    %174 = arith.addf %172, %173 : vector<2x128xf32>
    %175 = arith.negf %174 : vector<2x128xf32>
    %176 = math.exp %175 : vector<2x128xf32>
    %cst_68 = arith.constant 1.000000e+00 : f32
    %177 = vector.broadcast %cst_68 : f32 to vector<2x128xf32>
    %178 = arith.addf %177, %176 : vector<2x128xf32>
    %179 = arith.divf %177, %178 : vector<2x128xf32>
    %180 = math.tanh %174 : vector<2x128xf32>
    %181 = vector.extract_strided_slice %179 {offsets = [0, 0], sizes = [2, 32], strides = [1, 1]} : vector<2x128xf32> to vector<2x32xf32>
    %182 = vector.extract_strided_slice %179 {offsets = [0, 32], sizes = [2, 32], strides = [1, 1]} : vector<2x128xf32> to vector<2x32xf32>
    %183 = vector.extract_strided_slice %180 {offsets = [0, 64], sizes = [2, 32], strides = [1, 1]} : vector<2x128xf32> to vector<2x32xf32>
    %184 = vector.extract_strided_slice %179 {offsets = [0, 96], sizes = [2, 32], strides = [1, 1]} : vector<2x128xf32> to vector<2x32xf32>
    %185 = arith.mulf %182, %171 : vector<2x32xf32>
    %186 = arith.mulf %181, %183 : vector<2x32xf32>
    %187 = arith.addf %185, %186 : vector<2x32xf32>
    %188 = math.tanh %187 : vector<2x32xf32>
    %189 = arith.mulf %184, %188 : vector<2x32xf32>
    %c2_69 = arith.constant 2 : index
    %c0_70 = arith.constant 0 : index
    %190 = vector.load %arg11[%c2_69, %c0_70] : memref<16x128xf32, #tpu.memory_space<vmem>>, vector<2x128xf32>
    %cst_71 = arith.constant dense<0.000000e+00> : vector<2x128xf32>
    %191 = tpu.matmul %189, %169, %cst_71 {dimension_numbers = #tpu.dot_dimension_numbers<[1], [0], [0], [1], [0, 0, 1, 1], [], []>} : vector<2x32xf32>, vector<32x128xf32>, vector<2x128xf32> -> vector<2x128xf32>
    %192 = arith.addf %190, %191 : vector<2x128xf32>
    %193 = arith.negf %192 : vector<2x128xf32>
    %194 = math.exp %193 : vector<2x128xf32>
    %cst_72 = arith.constant 1.000000e+00 : f32
    %195 = vector.broadcast %cst_72 : f32 to vector<2x128xf32>
    %196 = arith.addf %195, %194 : vector<2x128xf32>
    %197 = arith.divf %195, %196 : vector<2x128xf32>
    %198 = math.tanh %192 : vector<2x128xf32>
    %199 = vector.extract_strided_slice %197 {offsets = [0, 0], sizes = [2, 32], strides = [1, 1]} : vector<2x128xf32> to vector<2x32xf32>
    %200 = vector.extract_strided_slice %197 {offsets = [0, 32], sizes = [2, 32], strides = [1, 1]} : vector<2x128xf32> to vector<2x32xf32>
    %201 = vector.extract_strided_slice %198 {offsets = [0, 64], sizes = [2, 32], strides = [1, 1]} : vector<2x128xf32> to vector<2x32xf32>
    %202 = vector.extract_strided_slice %197 {offsets = [0, 96], sizes = [2, 32], strides = [1, 1]} : vector<2x128xf32> to vector<2x32xf32>
    %203 = arith.mulf %200, %187 : vector<2x32xf32>
    %204 = arith.mulf %199, %201 : vector<2x32xf32>
    %205 = arith.addf %203, %204 : vector<2x32xf32>
    %206 = math.tanh %205 : vector<2x32xf32>
    %207 = arith.mulf %202, %206 : vector<2x32xf32>
    %c4_73 = arith.constant 4 : index
    %c0_74 = arith.constant 0 : index
    %208 = vector.load %arg11[%c4_73, %c0_74] : memref<16x128xf32, #tpu.memory_space<vmem>>, vector<2x128xf32>
    %cst_75 = arith.constant dense<0.000000e+00> : vector<2x128xf32>
    %209 = tpu.matmul %207, %169, %cst_75 {dimension_numbers = #tpu.dot_dimension_numbers<[1], [0], [0], [1], [0, 0, 1, 1], [], []>} : vector<2x32xf32>, vector<32x128xf32>, vector<2x128xf32> -> vector<2x128xf32>
    %210 = arith.addf %208, %209 : vector<2x128xf32>
    %211 = arith.negf %210 : vector<2x128xf32>
    %212 = math.exp %211 : vector<2x128xf32>
    %cst_76 = arith.constant 1.000000e+00 : f32
    %213 = vector.broadcast %cst_76 : f32 to vector<2x128xf32>
    %214 = arith.addf %213, %212 : vector<2x128xf32>
    %215 = arith.divf %213, %214 : vector<2x128xf32>
    %216 = math.tanh %210 : vector<2x128xf32>
    %217 = vector.extract_strided_slice %215 {offsets = [0, 0], sizes = [2, 32], strides = [1, 1]} : vector<2x128xf32> to vector<2x32xf32>
    %218 = vector.extract_strided_slice %215 {offsets = [0, 32], sizes = [2, 32], strides = [1, 1]} : vector<2x128xf32> to vector<2x32xf32>
    %219 = vector.extract_strided_slice %216 {offsets = [0, 64], sizes = [2, 32], strides = [1, 1]} : vector<2x128xf32> to vector<2x32xf32>
    %220 = vector.extract_strided_slice %215 {offsets = [0, 96], sizes = [2, 32], strides = [1, 1]} : vector<2x128xf32> to vector<2x32xf32>
    %221 = arith.mulf %218, %205 : vector<2x32xf32>
    %222 = arith.mulf %217, %219 : vector<2x32xf32>
    %223 = arith.addf %221, %222 : vector<2x32xf32>
    %224 = math.tanh %223 : vector<2x32xf32>
    %225 = arith.mulf %220, %224 : vector<2x32xf32>
    %c6_77 = arith.constant 6 : index
    %c0_78 = arith.constant 0 : index
    %226 = vector.load %arg11[%c6_77, %c0_78] : memref<16x128xf32, #tpu.memory_space<vmem>>, vector<2x128xf32>
    %cst_79 = arith.constant dense<0.000000e+00> : vector<2x128xf32>
    %227 = tpu.matmul %225, %169, %cst_79 {dimension_numbers = #tpu.dot_dimension_numbers<[1], [0], [0], [1], [0, 0, 1, 1], [], []>} : vector<2x32xf32>, vector<32x128xf32>, vector<2x128xf32> -> vector<2x128xf32>
    %228 = arith.addf %226, %227 : vector<2x128xf32>
    %229 = arith.negf %228 : vector<2x128xf32>
    %230 = math.exp %229 : vector<2x128xf32>
    %cst_80 = arith.constant 1.000000e+00 : f32
    %231 = vector.broadcast %cst_80 : f32 to vector<2x128xf32>
    %232 = arith.addf %231, %230 : vector<2x128xf32>
    %233 = arith.divf %231, %232 : vector<2x128xf32>
    %234 = math.tanh %228 : vector<2x128xf32>
    %235 = vector.extract_strided_slice %233 {offsets = [0, 0], sizes = [2, 32], strides = [1, 1]} : vector<2x128xf32> to vector<2x32xf32>
    %236 = vector.extract_strided_slice %233 {offsets = [0, 32], sizes = [2, 32], strides = [1, 1]} : vector<2x128xf32> to vector<2x32xf32>
    %237 = vector.extract_strided_slice %234 {offsets = [0, 64], sizes = [2, 32], strides = [1, 1]} : vector<2x128xf32> to vector<2x32xf32>
    %238 = vector.extract_strided_slice %233 {offsets = [0, 96], sizes = [2, 32], strides = [1, 1]} : vector<2x128xf32> to vector<2x32xf32>
    %239 = arith.mulf %236, %223 : vector<2x32xf32>
    %240 = arith.mulf %235, %237 : vector<2x32xf32>
    %241 = arith.addf %239, %240 : vector<2x32xf32>
    %242 = math.tanh %241 : vector<2x32xf32>
    %243 = arith.mulf %238, %242 : vector<2x32xf32>
    %c8_81 = arith.constant 8 : index
    %c0_82 = arith.constant 0 : index
    %244 = vector.load %arg11[%c8_81, %c0_82] : memref<16x128xf32, #tpu.memory_space<vmem>>, vector<2x128xf32>
    %cst_83 = arith.constant dense<0.000000e+00> : vector<2x128xf32>
    %245 = tpu.matmul %243, %169, %cst_83 {dimension_numbers = #tpu.dot_dimension_numbers<[1], [0], [0], [1], [0, 0, 1, 1], [], []>} : vector<2x32xf32>, vector<32x128xf32>, vector<2x128xf32> -> vector<2x128xf32>
    %246 = arith.addf %244, %245 : vector<2x128xf32>
    %247 = arith.negf %246 : vector<2x128xf32>
    %248 = math.exp %247 : vector<2x128xf32>
    %cst_84 = arith.constant 1.000000e+00 : f32
    %249 = vector.broadcast %cst_84 : f32 to vector<2x128xf32>
    %250 = arith.addf %249, %248 : vector<2x128xf32>
    %251 = arith.divf %249, %250 : vector<2x128xf32>
    %252 = math.tanh %246 : vector<2x128xf32>
    %253 = vector.extract_strided_slice %251 {offsets = [0, 0], sizes = [2, 32], strides = [1, 1]} : vector<2x128xf32> to vector<2x32xf32>
    %254 = vector.extract_strided_slice %251 {offsets = [0, 32], sizes = [2, 32], strides = [1, 1]} : vector<2x128xf32> to vector<2x32xf32>
    %255 = vector.extract_strided_slice %252 {offsets = [0, 64], sizes = [2, 32], strides = [1, 1]} : vector<2x128xf32> to vector<2x32xf32>
    %256 = vector.extract_strided_slice %251 {offsets = [0, 96], sizes = [2, 32], strides = [1, 1]} : vector<2x128xf32> to vector<2x32xf32>
    %257 = arith.mulf %254, %241 : vector<2x32xf32>
    %258 = arith.mulf %253, %255 : vector<2x32xf32>
    %259 = arith.addf %257, %258 : vector<2x32xf32>
    %260 = math.tanh %259 : vector<2x32xf32>
    %261 = arith.mulf %256, %260 : vector<2x32xf32>
    %c10_85 = arith.constant 10 : index
    %c0_86 = arith.constant 0 : index
    %262 = vector.load %arg11[%c10_85, %c0_86] : memref<16x128xf32, #tpu.memory_space<vmem>>, vector<2x128xf32>
    %cst_87 = arith.constant dense<0.000000e+00> : vector<2x128xf32>
    %263 = tpu.matmul %261, %169, %cst_87 {dimension_numbers = #tpu.dot_dimension_numbers<[1], [0], [0], [1], [0, 0, 1, 1], [], []>} : vector<2x32xf32>, vector<32x128xf32>, vector<2x128xf32> -> vector<2x128xf32>
    %264 = arith.addf %262, %263 : vector<2x128xf32>
    %265 = arith.negf %264 : vector<2x128xf32>
    %266 = math.exp %265 : vector<2x128xf32>
    %cst_88 = arith.constant 1.000000e+00 : f32
    %267 = vector.broadcast %cst_88 : f32 to vector<2x128xf32>
    %268 = arith.addf %267, %266 : vector<2x128xf32>
    %269 = arith.divf %267, %268 : vector<2x128xf32>
    %270 = math.tanh %264 : vector<2x128xf32>
    %271 = vector.extract_strided_slice %269 {offsets = [0, 0], sizes = [2, 32], strides = [1, 1]} : vector<2x128xf32> to vector<2x32xf32>
    %272 = vector.extract_strided_slice %269 {offsets = [0, 32], sizes = [2, 32], strides = [1, 1]} : vector<2x128xf32> to vector<2x32xf32>
    %273 = vector.extract_strided_slice %270 {offsets = [0, 64], sizes = [2, 32], strides = [1, 1]} : vector<2x128xf32> to vector<2x32xf32>
    %274 = vector.extract_strided_slice %269 {offsets = [0, 96], sizes = [2, 32], strides = [1, 1]} : vector<2x128xf32> to vector<2x32xf32>
    %275 = arith.mulf %272, %259 : vector<2x32xf32>
    %276 = arith.mulf %271, %273 : vector<2x32xf32>
    %277 = arith.addf %275, %276 : vector<2x32xf32>
    %278 = math.tanh %277 : vector<2x32xf32>
    %279 = arith.mulf %274, %278 : vector<2x32xf32>
    %c12_89 = arith.constant 12 : index
    %c0_90 = arith.constant 0 : index
    %280 = vector.load %arg11[%c12_89, %c0_90] : memref<16x128xf32, #tpu.memory_space<vmem>>, vector<2x128xf32>
    %cst_91 = arith.constant dense<0.000000e+00> : vector<2x128xf32>
    %281 = tpu.matmul %279, %169, %cst_91 {dimension_numbers = #tpu.dot_dimension_numbers<[1], [0], [0], [1], [0, 0, 1, 1], [], []>} : vector<2x32xf32>, vector<32x128xf32>, vector<2x128xf32> -> vector<2x128xf32>
    %282 = arith.addf %280, %281 : vector<2x128xf32>
    %283 = arith.negf %282 : vector<2x128xf32>
    %284 = math.exp %283 : vector<2x128xf32>
    %cst_92 = arith.constant 1.000000e+00 : f32
    %285 = vector.broadcast %cst_92 : f32 to vector<2x128xf32>
    %286 = arith.addf %285, %284 : vector<2x128xf32>
    %287 = arith.divf %285, %286 : vector<2x128xf32>
    %288 = math.tanh %282 : vector<2x128xf32>
    %289 = vector.extract_strided_slice %287 {offsets = [0, 0], sizes = [2, 32], strides = [1, 1]} : vector<2x128xf32> to vector<2x32xf32>
    %290 = vector.extract_strided_slice %287 {offsets = [0, 32], sizes = [2, 32], strides = [1, 1]} : vector<2x128xf32> to vector<2x32xf32>
    %291 = vector.extract_strided_slice %288 {offsets = [0, 64], sizes = [2, 32], strides = [1, 1]} : vector<2x128xf32> to vector<2x32xf32>
    %292 = vector.extract_strided_slice %287 {offsets = [0, 96], sizes = [2, 32], strides = [1, 1]} : vector<2x128xf32> to vector<2x32xf32>
    %293 = arith.mulf %290, %277 : vector<2x32xf32>
    %294 = arith.mulf %289, %291 : vector<2x32xf32>
    %295 = arith.addf %293, %294 : vector<2x32xf32>
    %296 = math.tanh %295 : vector<2x32xf32>
    %297 = arith.mulf %292, %296 : vector<2x32xf32>
    %c14_93 = arith.constant 14 : index
    %c0_94 = arith.constant 0 : index
    %298 = vector.load %arg11[%c14_93, %c0_94] : memref<16x128xf32, #tpu.memory_space<vmem>>, vector<2x128xf32>
    %cst_95 = arith.constant dense<0.000000e+00> : vector<2x128xf32>
    %299 = tpu.matmul %297, %169, %cst_95 {dimension_numbers = #tpu.dot_dimension_numbers<[1], [0], [0], [1], [0, 0, 1, 1], [], []>} : vector<2x32xf32>, vector<32x128xf32>, vector<2x128xf32> -> vector<2x128xf32>
    %300 = arith.addf %298, %299 : vector<2x128xf32>
    %301 = arith.negf %300 : vector<2x128xf32>
    %302 = math.exp %301 : vector<2x128xf32>
    %cst_96 = arith.constant 1.000000e+00 : f32
    %303 = vector.broadcast %cst_96 : f32 to vector<2x128xf32>
    %304 = arith.addf %303, %302 : vector<2x128xf32>
    %305 = arith.divf %303, %304 : vector<2x128xf32>
    %306 = math.tanh %300 : vector<2x128xf32>
    %307 = vector.extract_strided_slice %305 {offsets = [0, 0], sizes = [2, 32], strides = [1, 1]} : vector<2x128xf32> to vector<2x32xf32>
    %308 = vector.extract_strided_slice %305 {offsets = [0, 32], sizes = [2, 32], strides = [1, 1]} : vector<2x128xf32> to vector<2x32xf32>
    %309 = vector.extract_strided_slice %306 {offsets = [0, 64], sizes = [2, 32], strides = [1, 1]} : vector<2x128xf32> to vector<2x32xf32>
    %310 = vector.extract_strided_slice %305 {offsets = [0, 96], sizes = [2, 32], strides = [1, 1]} : vector<2x128xf32> to vector<2x32xf32>
    %311 = arith.mulf %308, %295 : vector<2x32xf32>
    %312 = arith.mulf %307, %309 : vector<2x32xf32>
    %313 = arith.addf %311, %312 : vector<2x32xf32>
    %314 = math.tanh %313 : vector<2x32xf32>
    %315 = arith.mulf %310, %314 : vector<2x32xf32>
    %c0_97 = arith.constant 0 : index
    %c0_98 = arith.constant 0 : index
    %316 = vector.load %arg7[%c0_97, %c0_98] : memref<32x4xf32, #tpu.memory_space<vmem>>, vector<32x4xf32>
    %cst_99 = arith.constant dense<0.000000e+00> : vector<2x4xf32>
    %317 = tpu.matmul %315, %316, %cst_99 {dimension_numbers = #tpu.dot_dimension_numbers<[1], [0], [0], [1], [0, 0, 1, 1], [], []>} : vector<2x32xf32>, vector<32x4xf32>, vector<2x4xf32> -> vector<2x4xf32>
    %c0_100 = arith.constant 0 : index
    %c0_101 = arith.constant 0 : index
    %318 = vector.load %arg8[%c0_100, %c0_101] : memref<1x4xf32, #tpu.memory_space<vmem>>, vector<1x4xf32>
    %319 = vector.broadcast %318 : vector<1x4xf32> to vector<2x4xf32>
    %320 = arith.addf %317, %319 : vector<2x4xf32>
    %c0_102 = arith.constant 0 : index
    %c0_103 = arith.constant 0 : index
    %321 = vector.load %arg9[%c0_102, %c0_103] : memref<2x4xf32, #tpu.memory_space<vmem>>, vector<2x4xf32>
    tpu.vector_store %arg9[%c0_102, %c0_103], %320 {strides = array<i32>} : memref<2x4xf32, #tpu.memory_space<vmem>>, vector<2x4xf32>,
    return
  }
}

</mosaic_0001>

<llo_original>
// kernel: lstm_model_forward.1
$region0: #{lstm_model_forward.1}
  #allocation0 [shape = 'u32[]', space=smem, size = 0x4, offset = 0x4, fixed_abs, tag = 'smem constant byte address 0x4 - core index']
  #allocation1 [shape = 'u32[72,128]{1,0:T(1,128)}', space=vmem, size = 0x9000, scoped, tag = 'internal scratch']
  #allocation2 [shape = 'f32[16,32]{1,0:T(8,128)}', space=vmem, size = 0x2000, scoped, tag = 'scratch operand']
  #allocation3 [shape = 'f32[16,128]{1,0:T(8,128)}', space=vmem, size = 0x2000, scoped, tag = 'scratch operand']
  %s0 = inlined_call_operand.vmem [shape: f32[16,4], index: 0, kind: input, shape index: {}]
  %s1 = inlined_call_operand.vmem [shape: f32[4,128], index: 1, kind: input, shape index: {}]
  %s2 = inlined_call_operand.vmem [shape: f32[32,128], index: 2, kind: input, shape index: {}]
  %s3 = inlined_call_operand.vmem [shape: f32[1,128], index: 3, kind: input, shape index: {}]
  %s4 = inlined_call_operand.hbm [shape: f32[32,128], index: 4, kind: input, shape index: {}]
  %s5 = inlined_call_operand.hbm [shape: f32[32,128], index: 5, kind: input, shape index: {}]
  %s6 = inlined_call_operand.vmem [shape: f32[1,128], index: 6, kind: input, shape index: {}]
  %s7 = inlined_call_operand.vmem [shape: f32[32,4], index: 7, kind: input, shape index: {}]
  %s8 = inlined_call_operand.vmem [shape: f32[1,4], index: 8, kind: input, shape index: {}]
  %s9 = inlined_call_operand.hbm [shape: f32[2,4], index: 9, kind: output, shape index: {}]
  %s10 = sld [smem:[#allocation0]]
  $region54: #{lstm_model_forward.1} parent=0
    _
  %s12 = ssub.s32 1, %s10
  %s13 = scalar_select 0, %s12, %s10
  $region1: #{lstm_model_forward.1} parent=0
    #allocation4 [shape = 'u8[16384]{0}', space=vmem, size = 0x4000, scoped, tag = 'input window, operand 4, single buffered']
    #allocation5 [shape = 's32[1]{0}', space=sflag, size = 0x4, scoped, tag = 'scoped memory for lstm_model_forward.1']
    #allocation6 [shape = 's32[1]{0}', space=sflag, size = 0x4, scoped, tag = 'scoped memory for lstm_model_forward.1']
    #allocation7 [shape = 'u8[16384]{0}', space=vmem, size = 0x4000, scoped, tag = 'input window, operand 5, single buffered']
    #allocation8 [shape = 's32[1]{0}', space=sflag, size = 0x4, scoped, tag = 'scoped memory for lstm_model_forward.1']
    #allocation9 [shape = 'u8[1024]{0}', space=vmem, size = 0x400, scoped, tag = 'output window, operand 0, single buffered']
    %14 = vsyncpa [#allocation5], 0
    %15 = vsyncpa [#allocation8], 0
    %16 = vsyncpa [#allocation6], 0
    // Predicated region
    $region2: #{lstm_model_forward.1} parent=1 // pred_check
      _
    $region3: #{lstm_model_forward.1} parent=1 // pred_check_branch
      %18 = sbr.rel (0) target = $region5
    $region4: #{lstm_model_forward.1} parent=1 // pred_region
      _
    $region5: #{lstm_model_forward.1} parent=1 // pred_fallthru
      _
    // Predicated region
    $region6: #{lstm_model_forward.1} parent=1 // pred_check
      _
    $region7: #{lstm_model_forward.1} parent=1 // pred_check_branch
      %20 = sbr.rel (0) target = $region9
    $region8: #{lstm_model_forward.1} parent=1 // pred_region
      _
    $region9: #{lstm_model_forward.1} parent=1 // pred_fallthru
      _
    // Predicated region
    $region10: #{lstm_model_forward.1} parent=1 // pred_check
      _
    $region11: #{lstm_model_forward.1} parent=1 // pred_check_branch
      %22 = sbr.rel (0) target = $region13
    $region12: #{lstm_model_forward.1} parent=1 // pred_region
      _
    $region13: #{lstm_model_forward.1} parent=1 // pred_fallthru
      _
    // Predicated region
    $region14: #{lstm_model_forward.1} parent=1 // pred_check
      _
    $region15: #{lstm_model_forward.1} parent=1 // pred_check_branch
      %24 = sbr.rel (0) target = $region17
    $region16: #{lstm_model_forward.1} parent=1 // pred_region
      _
    $region17: #{lstm_model_forward.1} parent=1 // pred_fallthru
      _
    // Predicated region
    $region18: #{lstm_model_forward.1} parent=1 // pred_check
      _
    $region19: #{lstm_model_forward.1} parent=1 // pred_check_branch
      %26 = sbr.rel (0) target = $region21
    $region20: #{lstm_model_forward.1} parent=1 // pred_region
      %28 = vsyncadd [#allocation5], 0
      %s29 = sshll.u32 %s4, 4
      %s30 = int_to_ptr.hbm [resolvable:$true] %s29
      %s31 = sshll.u32 [#allocation4], 4
      %s32 = int_to_ptr.vmem [resolvable:$true] %s31
      %37 = dma.hbm_to_vmem [thread:$0]  %s30, 512, %s32, [#allocation5], 128, 128, 8
    $region21: #{lstm_model_forward.1} parent=1 // pred_fallthru
      _
    // Predicated region
    $region22: #{lstm_model_forward.1} parent=1 // pred_check
      _
    $region23: #{lstm_model_forward.1} parent=1 // pred_check_branch
      %39 = sbr.rel (0) target = $region25
    $region24: #{lstm_model_forward.1} parent=1 // pred_region
      %41 = vsyncadd [#allocation8], 0
      %s42 = sshll.u32 %s5, 4
      %s43 = int_to_ptr.hbm [resolvable:$true] %s42
      %s44 = sshll.u32 [#allocation7], 4
      %s45 = int_to_ptr.vmem [resolvable:$true] %s44
      %50 = dma.hbm_to_vmem [thread:$0]  %s43, 512, %s45, [#allocation8], 128, 128, 8
    $region25: #{lstm_model_forward.1} parent=1 // pred_fallthru
      _
    // Predicated region
    $region26: #{lstm_model_forward.1} parent=1 // pred_check
      _
    $region27: #{lstm_model_forward.1} parent=1 // pred_check_branch
      %52 = sbr.rel (0) target = $region29
    $region28: #{lstm_model_forward.1} parent=1 // pred_region
      _
    $region29: #{lstm_model_forward.1} parent=1 // pred_fallthru
      _
    // Predicated region
    $region30: #{lstm_model_forward.1} parent=1 // pred_check
      _
    $region31: #{lstm_model_forward.1} parent=1 // pred_check_branch
      %54 = sbr.rel (0) target = $region33
    $region32: #{lstm_model_forward.1} parent=1 // pred_region
      _
    $region33: #{lstm_model_forward.1} parent=1 // pred_fallthru
      _
    // Predicated region
    $region34: #{lstm_model_forward.1} parent=1 // pred_check
      _
    $region35: #{lstm_model_forward.1} parent=1 // pred_check_branch
      %56 = sbr.rel (0) target = $region37
    $region36: #{lstm_model_forward.1} parent=1 // pred_region
      _
    $region37: #{lstm_model_forward.1} parent=1 // pred_fallthru
      _
    // Predicated region
    $region38: #{lstm_model_forward.1} parent=1 // pred_check
      _
    $region39: #{lstm_model_forward.1} parent=1 // pred_check_branch
      %58 = sbr.rel (0) target = $region41
    $region40: #{lstm_model_forward.1} parent=1 // pred_region
      %60 = dma.done [#allocation5], 512
    $region41: #{lstm_model_forward.1} parent=1 // pred_fallthru
      _
    // Predicated region
    $region42: #{lstm_model_forward.1} parent=1 // pred_check
      _
    $region43: #{lstm_model_forward.1} parent=1 // pred_check_branch
      %62 = sbr.rel (0) target = $region45
    $region44: #{lstm_model_forward.1} parent=1 // pred_region
      %64 = dma.done [#allocation8], 512
    $region45: #{lstm_model_forward.1} parent=1 // pred_fallthru
      _
    %v65 = vld [vmem:[%s0] sm:$0xff]
    %v66 = vld [vmem:[%s0 + $0x8] sm:$0xff]
    %v67 = vld [vmem:[%s1] sm:$0xf]
    %v68 = vld [vmem:[%s3] sm:$0x1]
    %v70 = vperm.slane %v68, 0
    %vm72 = vcmask 31744
    %v74 = vsel %vm72, %v65, 0
    %v77 = vsel %vm72, %v66, 0
    %vm79 = vcmask 1043456
    %v81 = vsel %vm79, %v67, 0
    %83 = vmatpush.msra.mxu0 0.0
    %84 = vmatpush.msra.mxu0 0.0
    %85 = vmatpush.msra.mxu0 0.0
    %86 = vmatpush.msra.mxu0 0.0
    %87 = vmatpush.msra.mxu0 0.0
    %88 = vmatpush.msra.mxu0 0.0
    %89 = vmatpush.msra.mxu0 0.0
    %90 = vmatpush.msra.mxu0 0.0
    %91 = vmatpush.msra.mxu0 0.0
    %92 = vmatpush.msra.mxu0 0.0
    %93 = vmatpush.msra.mxu0 0.0
    %94 = vmatpush.msra.mxu0 0.0
    %95 = vmatpush.msra.mxu0 0.0
    %96 = vmatpush.msra.mxu0 0.0
    %97 = vmatpush.msra.mxu0 0.0
    %98 = vmatpush.msra.mxu0 %v81
    %99 = vmatmul.f32.gmra.mxu0 %v74
    %v100 = vpop.f32.mrf.mxu0
    %v101 = vadd.f32 %v70, %v100
    %102 = vmatmul.f32.gmra.mxu0 %v77
    %v103 = vpop.f32.mrf.mxu0
    %v104 = vadd.f32 %v70, %v103
    %105 = vdwg.mxu0
    %106 = vst [vmem:[#allocation3] sm:$0xff] %v101
    %107 = vst [vmem:[#allocation3 + $0x8] sm:$0xff] %v104
    %v108 = vld [vmem:[%s2] sm:$0xff]
    %v109 = vld [vmem:[%s2 + $0x8] sm:$0xff]
    %v110 = vld [vmem:[%s2 + $0x10] sm:$0xff]
    %v111 = vld [vmem:[%s2 + $0x18] sm:$0xff]
    %v112 = vld [vmem:[#allocation3] sm:$0x3]
    %vm113 = vcmask 261120
    %v115 = vsel %vm113, 0.0, 0
    %117 = vmatpush.msra.mxu0 0.0
    %118 = vmatpush.msra.mxu0 0.0
    %119 = vmatpush.msra.mxu0 0.0
    %120 = vmatpush.msra.mxu0 0.0
    %121 = vmatpush.msra.mxu0 0.0
    %122 = vmatpush.msra.mxu0 0.0
    %123 = vmatpush.msra.mxu0 0.0
    %124 = vmatpush.msra.mxu0 0.0
    %125 = vmatpush.msra.mxu0 0.0
    %126 = vmatpush.msra.mxu0 0.0
    %127 = vmatpush.msra.mxu0 0.0
    %128 = vmatpush.msra.mxu0 0.0
    %129 = vmatpush.msra.mxu0 %v111
    %130 = vmatpush.msra.mxu0 %v110
    %131 = vmatpush.msra.mxu0 %v109
    %132 = vmatpush.msra.mxu0 %v108
    %133 = vmatmul.f32.gmra.mxu0 %v115
    %v134 = vpop.f32.mrf.mxu0
    %v135 = vadd.f32 0.0, %v134
    %136 = vdwg.mxu0
    %v137 = vadd.f32 %v112, %v135
    %v138 = vxor.u32 %v137, 2147483648
    %v139 = vmul.f32 %v138, 1.442695
    %v140 = vpow.pop %v139
    %v141 = vadd.f32 %v140, 1.0
    %v142 = vrcp.pop %v141
    %v143 = vmul.f32 %v141, %v142
    %v144 = vsub.f32 1.0, %v143
    %v145 = vmul.f32 %v142, %v144
    %v146 = vadd.f32 %v142, %v145
    %vm147 = vweird.f32 %v141
    %vm148 = vweird.f32 %v142
    %vm149 = vmor %vm147, %vm148
    %v150 = vsel %vm149, %v142, %v146
    %v151 = vand.u32 2147483647, %v141
    %vm152 = vcmp.eq.f32.partialorder %v151, 8.507059e+37
    %v153 = vand.u32 %v141, 2147483648
    %v154 = vor.u32 1.1754944e-38, %v153
    %v155 = vsel %vm152, %v154, %v150
    %v156 = vmul.f32 1.0, %v155
    %v157 = vtanh.pop %v137
    %v158 = vmul.f32 %v156, 0.0
    %160 = vrot.lane.b32.xlu0 %v157, 64
    %v161 = vpop.permute.xlu0 %160
    %v163 = vmul.f32 %v156, %v161
    %165 = vrot.lane.b32.xlu0 %v163, 32
    %v166 = vpop.permute.xlu0 %165
    %v168 = vadd.f32 %v158, %v166
    %v169 = vtanh.pop %v168
    %171 = vrot.lane.b32.xlu0 %v169, 64
    %v172 = vpop.permute.xlu0 %171
    %v174 = vmul.f32 %v156, %v172
    %176 = vrot.lane.b32.xlu0 %v174, 32
    %v177 = vpop.permute.xlu0 %176
    %vm179 = vcmask 254976
    %180 = vst.msk [vmem:[#allocation2] sm:$0x3] %vm179, %v177
    %v181 = vld [vmem:[#allocation3 + $0x2] sm:$0x3]
    %v182 = vsel %vm113, %v177, 0
    %184 = vmatpush.msra.mxu0 0.0
    %185 = vmatpush.msra.mxu0 0.0
    %186 = vmatpush.msra.mxu0 0.0
    %187 = vmatpush.msra.mxu0 0.0
    %188 = vmatpush.msra.mxu0 0.0
    %189 = vmatpush.msra.mxu0 0.0
    %190 = vmatpush.msra.mxu0 0.0
    %191 = vmatpush.msra.mxu0 0.0
    %192 = vmatpush.msra.mxu0 0.0
    %193 = vmatpush.msra.mxu0 0.0
    %194 = vmatpush.msra.mxu0 0.0
    %195 = vmatpush.msra.mxu0 0.0
    %196 = vmatpush.msra.mxu0 %v111
    %197 = vmatpush.msra.mxu0 %v110
    %198 = vmatpush.msra.mxu0 %v109
    %199 = vmatpush.msra.mxu0 %v108
    %200 = vmatmul.f32.gmra.mxu0 %v182
    %v201 = vpop.f32.mrf.mxu0
    %v202 = vadd.f32 0.0, %v201
    %203 = vdwg.mxu0
    %v204 = vadd.f32 %v181, %v202
    %v205 = vxor.u32 %v204, 2147483648
    %v206 = vmul.f32 %v205, 1.442695
    %v207 = vpow.pop %v206
    %v208 = vadd.f32 %v207, 1.0
    %v209 = vrcp.pop %v208
    %v210 = vmul.f32 %v208, %v209
    %v211 = vsub.f32 1.0, %v210
    %v212 = vmul.f32 %v209, %v211
    %v213 = vadd.f32 %v209, %v212
    %vm214 = vweird.f32 %v208
    %vm215 = vweird.f32 %v209
    %vm216 = vmor %vm214, %vm215
    %v217 = vsel %vm216, %v209, %v213
    %v218 = vand.u32 2147483647, %v208
    %vm219 = vcmp.eq.f32.partialorder %v218, 8.507059e+37
    %v220 = vand.u32 %v208, 2147483648
    %v221 = vor.u32 1.1754944e-38, %v220
    %v222 = vsel %vm219, %v221, %v217
    %v223 = vmul.f32 1.0, %v222
    %v224 = vtanh.pop %v204
    %v225 = vmul.f32 %v223, %v168
    %227 = vrot.lane.b32.xlu0 %v224, 64
    %v228 = vpop.permute.xlu0 %227
    %v230 = vmul.f32 %v223, %v228
    %232 = vrot.lane.b32.xlu0 %v230, 32
    %v233 = vpop.permute.xlu0 %232
    %v235 = vadd.f32 %v225, %v233
    %v236 = vtanh.pop %v235
    %238 = vrot.lane.b32.xlu0 %v236, 64
    %v239 = vpop.permute.xlu0 %238
    %v241 = vmul.f32 %v223, %v239
    %243 = vrot.lane.b32.xlu0 %v241, 32
    %v244 = vpop.permute.xlu0 %243
    %246 = vst.msk [vmem:[#allocation2 + $0x2] sm:$0x3] %vm179, %v244
    %v247 = vld [vmem:[#allocation3 + $0x4] sm:$0x3]
    %v248 = vsel %vm113, %v244, 0
    %250 = vmatpush.msra.mxu0 0.0
    %251 = vmatpush.msra.mxu0 0.0
    %252 = vmatpush.msra.mxu0 0.0
    %253 = vmatpush.msra.mxu0 0.0
    %254 = vmatpush.msra.mxu0 0.0
    %255 = vmatpush.msra.mxu0 0.0
    %256 = vmatpush.msra.mxu0 0.0
    %257 = vmatpush.msra.mxu0 0.0
    %258 = vmatpush.msra.mxu0 0.0
    %259 = vmatpush.msra.mxu0 0.0
    %260 = vmatpush.msra.mxu0 0.0
    %261 = vmatpush.msra.mxu0 0.0
    %262 = vmatpush.msra.mxu0 %v111
    %263 = vmatpush.msra.mxu0 %v110
    %264 = vmatpush.msra.mxu0 %v109
    %265 = vmatpush.msra.mxu0 %v108
    %266 = vmatmul.f32.gmra.mxu0 %v248
    %v267 = vpop.f32.mrf.mxu0
    %v268 = vadd.f32 0.0, %v267
    %269 = vdwg.mxu0
    %v270 = vadd.f32 %v247, %v268
    %v271 = vxor.u32 %v270, 2147483648
    %v272 = vmul.f32 %v271, 1.442695
    %v273 = vpow.pop %v272
    %v274 = vadd.f32 %v273, 1.0
    %v275 = vrcp.pop %v274
    %v276 = vmul.f32 %v274, %v275
    %v277 = vsub.f32 1.0, %v276
    %v278 = vmul.f32 %v275, %v277
    %v279 = vadd.f32 %v275, %v278
    %vm280 = vweird.f32 %v274
    %vm281 = vweird.f32 %v275
    %vm282 = vmor %vm280, %vm281
    %v283 = vsel %vm282, %v275, %v279
    %v284 = vand.u32 2147483647, %v274
    %vm285 = vcmp.eq.f32.partialorder %v284, 8.507059e+37
    %v286 = vand.u32 %v274, 2147483648
    %v287 = vor.u32 1.1754944e-38, %v286
    %v288 = vsel %vm285, %v287, %v283
    %v289 = vmul.f32 1.0, %v288
    %v290 = vtanh.pop %v270
    %v291 = vmul.f32 %v289, %v235
    %293 = vrot.lane.b32.xlu0 %v290, 64
    %v294 = vpop.permute.xlu0 %293
    %v296 = vmul.f32 %v289, %v294
    %298 = vrot.lane.b32.xlu0 %v296, 32
    %v299 = vpop.permute.xlu0 %298
    %v301 = vadd.f32 %v291, %v299
    %v302 = vtanh.pop %v301
    %304 = vrot.lane.b32.xlu0 %v302, 64
    %v305 = vpop.permute.xlu0 %304
    %v307 = vmul.f32 %v289, %v305
    %309 = vrot.lane.b32.xlu0 %v307, 32
    %v310 = vpop.permute.xlu0 %309
    %312 = vst.msk [vmem:[#allocation2 + $0x4] sm:$0x3] %vm179, %v310
    %v313 = vld [vmem:[#allocation3 + $0x6] sm:$0x3]
    %v314 = vsel %vm113, %v310, 0
    %316 = vmatpush.msra.mxu0 0.0
    %317 = vmatpush.msra.mxu0 0.0
    %318 = vmatpush.msra.mxu0 0.0
    %319 = vmatpush.msra.mxu0 0.0
    %320 = vmatpush.msra.mxu0 0.0
    %321 = vmatpush.msra.mxu0 0.0
    %322 = vmatpush.msra.mxu0 0.0
    %323 = vmatpush.msra.mxu0 0.0
    %324 = vmatpush.msra.mxu0 0.0
    %325 = vmatpush.msra.mxu0 0.0
    %326 = vmatpush.msra.mxu0 0.0
    %327 = vmatpush.msra.mxu0 0.0
    %328 = vmatpush.msra.mxu0 %v111
    %329 = vmatpush.msra.mxu0 %v110
    %330 = vmatpush.msra.mxu0 %v109
    %331 = vmatpush.msra.mxu0 %v108
    %332 = vmatmul.f32.gmra.mxu0 %v314
    %v333 = vpop.f32.mrf.mxu0
    %v334 = vadd.f32 0.0, %v333
    %335 = vdwg.mxu0
    %v336 = vadd.f32 %v313, %v334
    %v337 = vxor.u32 %v336, 2147483648
    %v338 = vmul.f32 %v337, 1.442695
    %v339 = vpow.pop %v338
    %v340 = vadd.f32 %v339, 1.0
    %v341 = vrcp.pop %v340
    %v342 = vmul.f32 %v340, %v341
    %v343 = vsub.f32 1.0, %v342
    %v344 = vmul.f32 %v341, %v343
    %v345 = vadd.f32 %v341, %v344
    %vm346 = vweird.f32 %v340
    %vm347 = vweird.f32 %v341
    %vm348 = vmor %vm346, %vm347
    %v349 = vsel %vm348, %v341, %v345
    %v350 = vand.u32 2147483647, %v340
    %vm351 = vcmp.eq.f32.partialorder %v350, 8.507059e+37
    %v352 = vand.u32 %v340, 2147483648
    %v353 = vor.u32 1.1754944e-38, %v352
    %v354 = vsel %vm351, %v353, %v349
    %v355 = vmul.f32 1.0, %v354
    %v356 = vtanh.pop %v336
    %v357 = vmul.f32 %v355, %v301
    %359 = vrot.lane.b32.xlu0 %v356, 64
    %v360 = vpop.permute.xlu0 %359
    %v362 = vmul.f32 %v355, %v360
    %364 = vrot.lane.b32.xlu0 %v362, 32
    %v365 = vpop.permute.xlu0 %364
    %v367 = vadd.f32 %v357, %v365
    %v368 = vtanh.pop %v367
    %370 = vrot.lane.b32.xlu0 %v368, 64
    %v371 = vpop.permute.xlu0 %370
    %v373 = vmul.f32 %v355, %v371
    %375 = vrot.lane.b32.xlu0 %v373, 32
    %v376 = vpop.permute.xlu0 %375
    %378 = vst.msk [vmem:[#allocation2 + $0x6] sm:$0x3] %vm179, %v376
    %v379 = vld [vmem:[#allocation3 + $0x8] sm:$0x3]
    %v380 = vsel %vm113, %v376, 0
    %382 = vmatpush.msra.mxu0 0.0
    %383 = vmatpush.msra.mxu0 0.0
    %384 = vmatpush.msra.mxu0 0.0
    %385 = vmatpush.msra.mxu0 0.0
    %386 = vmatpush.msra.mxu0 0.0
    %387 = vmatpush.msra.mxu0 0.0
    %388 = vmatpush.msra.mxu0 0.0
    %389 = vmatpush.msra.mxu0 0.0
    %390 = vmatpush.msra.mxu0 0.0
    %391 = vmatpush.msra.mxu0 0.0
    %392 = vmatpush.msra.mxu0 0.0
    %393 = vmatpush.msra.mxu0 0.0
    %394 = vmatpush.msra.mxu0 %v111
    %395 = vmatpush.msra.mxu0 %v110
    %396 = vmatpush.msra.mxu0 %v109
    %397 = vmatpush.msra.mxu0 %v108
    %398 = vmatmul.f32.gmra.mxu0 %v380
    %v399 = vpop.f32.mrf.mxu0
    %v400 = vadd.f32 0.0, %v399
    %401 = vdwg.mxu0
    %v402 = vadd.f32 %v379, %v400
    %v403 = vxor.u32 %v402, 2147483648
    %v404 = vmul.f32 %v403, 1.442695
    %v405 = vpow.pop %v404
    %v406 = vadd.f32 %v405, 1.0
    %v407 = vrcp.pop %v406
    %v408 = vmul.f32 %v406, %v407
    %v409 = vsub.f32 1.0, %v408
    %v410 = vmul.f32 %v407, %v409
    %v411 = vadd.f32 %v407, %v410
    %vm412 = vweird.f32 %v406
    %vm413 = vweird.f32 %v407
    %vm414 = vmor %vm412, %vm413
    %v415 = vsel %vm414, %v407, %v411
    %v416 = vand.u32 2147483647, %v406
    %vm417 = vcmp.eq.f32.partialorder %v416, 8.507059e+37
    %v418 = vand.u32 %v406, 2147483648
    %v419 = vor.u32 1.1754944e-38, %v418
    %v420 = vsel %vm417, %v419, %v415
    %v421 = vmul.f32 1.0, %v420
    %v422 = vtanh.pop %v402
    %v423 = vmul.f32 %v421, %v367
    %425 = vrot.lane.b32.xlu0 %v422, 64
    %v426 = vpop.permute.xlu0 %425
    %v428 = vmul.f32 %v421, %v426
    %430 = vrot.lane.b32.xlu0 %v428, 32
    %v431 = vpop.permute.xlu0 %430
    %v433 = vadd.f32 %v423, %v431
    %v434 = vtanh.pop %v433
    %436 = vrot.lane.b32.xlu0 %v434, 64
    %v437 = vpop.permute.xlu0 %436
    %v439 = vmul.f32 %v421, %v437
    %441 = vrot.lane.b32.xlu0 %v439, 32
    %v442 = vpop.permute.xlu0 %441
    %444 = vst.msk [vmem:[#allocation2 + $0x8] sm:$0x3] %vm179, %v442
    %v445 = vld [vmem:[#allocation3 + $0xa] sm:$0x3]
    %v446 = vsel %vm113, %v442, 0
    %448 = vmatpush.msra.mxu0 0.0
    %449 = vmatpush.msra.mxu0 0.0
    %450 = vmatpush.msra.mxu0 0.0
    %451 = vmatpush.msra.mxu0 0.0
    %452 = vmatpush.msra.mxu0 0.0
    %453 = vmatpush.msra.mxu0 0.0
    %454 = vmatpush.msra.mxu0 0.0
    %455 = vmatpush.msra.mxu0 0.0
    %456 = vmatpush.msra.mxu0 0.0
    %457 = vmatpush.msra.mxu0 0.0
    %458 = vmatpush.msra.mxu0 0.0
    %459 = vmatpush.msra.mxu0 0.0
    %460 = vmatpush.msra.mxu0 %v111
    %461 = vmatpush.msra.mxu0 %v110
    %462 = vmatpush.msra.mxu0 %v109
    %463 = vmatpush.msra.mxu0 %v108
    %464 = vmatmul.f32.gmra.mxu0 %v446
    %v465 = vpop.f32.mrf.mxu0
    %v466 = vadd.f32 0.0, %v465
    %467 = vdwg.mxu0
    %v468 = vadd.f32 %v445, %v466
    %v469 = vxor.u32 %v468, 2147483648
    %v470 = vmul.f32 %v469, 1.442695
    %v471 = vpow.pop %v470
    %v472 = vadd.f32 %v471, 1.0
    %v473 = vrcp.pop %v472
    %v474 = vmul.f32 %v472, %v473
    %v475 = vsub.f32 1.0, %v474
    %v476 = vmul.f32 %v473, %v475
    %v477 = vadd.f32 %v473, %v476
    %vm478 = vweird.f32 %v472
    %vm479 = vweird.f32 %v473
    %vm480 = vmor %vm478, %vm479
    %v481 = vsel %vm480, %v473, %v477
    %v482 = vand.u32 2147483647, %v472
    %vm483 = vcmp.eq.f32.partialorder %v482, 8.507059e+37
    %v484 = vand.u32 %v472, 2147483648
    %v485 = vor.u32 1.1754944e-38, %v484
    %v486 = vsel %vm483, %v485, %v481
    %v487 = vmul.f32 1.0, %v486
    %v488 = vtanh.pop %v468
    %v489 = vmul.f32 %v487, %v433
    %491 = vrot.lane.b32.xlu0 %v488, 64
    %v492 = vpop.permute.xlu0 %491
    %v494 = vmul.f32 %v487, %v492
    %496 = vrot.lane.b32.xlu0 %v494, 32
    %v497 = vpop.permute.xlu0 %496
    %v499 = vadd.f32 %v489, %v497
    %v500 = vtanh.pop %v499
    %502 = vrot.lane.b32.xlu0 %v500, 64
    %v503 = vpop.permute.xlu0 %502
    %v505 = vmul.f32 %v487, %v503
    %507 = vrot.lane.b32.xlu0 %v505, 32
    %v508 = vpop.permute.xlu0 %507
    %510 = vst.msk [vmem:[#allocation2 + $0xa] sm:$0x3] %vm179, %v508
    %v511 = vld [vmem:[#allocation3 + $0xc] sm:$0x3]
    %v512 = vsel %vm113, %v508, 0
    %514 = vmatpush.msra.mxu0 0.0
    %515 = vmatpush.msra.mxu0 0.0
    %516 = vmatpush.msra.mxu0 0.0
    %517 = vmatpush.msra.mxu0 0.0
    %518 = vmatpush.msra.mxu0 0.0
    %519 = vmatpush.msra.mxu0 0.0
    %520 = vmatpush.msra.mxu0 0.0
    %521 = vmatpush.msra.mxu0 0.0
    %522 = vmatpush.msra.mxu0 0.0
    %523 = vmatpush.msra.mxu0 0.0
    %524 = vmatpush.msra.mxu0 0.0
    %525 = vmatpush.msra.mxu0 0.0
    %526 = vmatpush.msra.mxu0 %v111
    %527 = vmatpush.msra.mxu0 %v110
    %528 = vmatpush.msra.mxu0 %v109
    %529 = vmatpush.msra.mxu0 %v108
    %530 = vmatmul.f32.gmra.mxu0 %v512
    %v531 = vpop.f32.mrf.mxu0
    %v532 = vadd.f32 0.0, %v531
    %533 = vdwg.mxu0
    %v534 = vadd.f32 %v511, %v532
    %v535 = vxor.u32 %v534, 2147483648
    %v536 = vmul.f32 %v535, 1.442695
    %v537 = vpow.pop %v536
    %v538 = vadd.f32 %v537, 1.0
    %v539 = vrcp.pop %v538
    %v540 = vmul.f32 %v538, %v539
    %v541 = vsub.f32 1.0, %v540
    %v542 = vmul.f32 %v539, %v541
    %v543 = vadd.f32 %v539, %v542
    %vm544 = vweird.f32 %v538
    %vm545 = vweird.f32 %v539
    %vm546 = vmor %vm544, %vm545
    %v547 = vsel %vm546, %v539, %v543
    %v548 = vand.u32 2147483647, %v538
    %vm549 = vcmp.eq.f32.partialorder %v548, 8.507059e+37
    %v550 = vand.u32 %v538, 2147483648
    %v551 = vor.u32 1.1754944e-38, %v550
    %v552 = vsel %vm549, %v551, %v547
    %v553 = vmul.f32 1.0, %v552
    %v554 = vtanh.pop %v534
    %v555 = vmul.f32 %v553, %v499
    %557 = vrot.lane.b32.xlu0 %v554, 64
    %v558 = vpop.permute.xlu0 %557
    %v560 = vmul.f32 %v553, %v558
    %562 = vrot.lane.b32.xlu0 %v560, 32
    %v563 = vpop.permute.xlu0 %562
    %v565 = vadd.f32 %v555, %v563
    %v566 = vtanh.pop %v565
    %568 = vrot.lane.b32.xlu0 %v566, 64
    %v569 = vpop.permute.xlu0 %568
    %v571 = vmul.f32 %v553, %v569
    %573 = vrot.lane.b32.xlu0 %v571, 32
    %v574 = vpop.permute.xlu0 %573
    %576 = vst.msk [vmem:[#allocation2 + $0xc] sm:$0x3] %vm179, %v574
    %v577 = vld [vmem:[#allocation3 + $0xe] sm:$0x3]
    %v578 = vsel %vm113, %v574, 0
    %580 = vmatpush.msra.mxu0 0.0
    %581 = vmatpush.msra.mxu0 0.0
    %582 = vmatpush.msra.mxu0 0.0
    %583 = vmatpush.msra.mxu0 0.0
    %584 = vmatpush.msra.mxu0 0.0
    %585 = vmatpush.msra.mxu0 0.0
    %586 = vmatpush.msra.mxu0 0.0
    %587 = vmatpush.msra.mxu0 0.0
    %588 = vmatpush.msra.mxu0 0.0
    %589 = vmatpush.msra.mxu0 0.0
    %590 = vmatpush.msra.mxu0 0.0
    %591 = vmatpush.msra.mxu0 0.0
    %592 = vmatpush.msra.mxu0 %v111
    %593 = vmatpush.msra.mxu0 %v110
    %594 = vmatpush.msra.mxu0 %v109
    %595 = vmatpush.msra.mxu0 %v108
    %596 = vmatmul.f32.gmra.mxu0 %v578
    %v597 = vpop.f32.mrf.mxu0
    %v598 = vadd.f32 0.0, %v597
    %599 = vdwg.mxu0
    %v600 = vadd.f32 %v577, %v598
    %v601 = vxor.u32 %v600, 2147483648
    %v602 = vmul.f32 %v601, 1.442695
    %v603 = vpow.pop %v602
    %v604 = vadd.f32 %v603, 1.0
    %v605 = vrcp.pop %v604
    %v606 = vmul.f32 %v604, %v605
    %v607 = vsub.f32 1.0, %v606
    %v608 = vmul.f32 %v605, %v607
    %v609 = vadd.f32 %v605, %v608
    %vm610 = vweird.f32 %v604
    %vm611 = vweird.f32 %v605
    %vm612 = vmor %vm610, %vm611
    %v613 = vsel %vm612, %v605, %v609
    %v614 = vand.u32 2147483647, %v604
    %vm615 = vcmp.eq.f32.partialorder %v614, 8.507059e+37
    %v616 = vand.u32 %v604, 2147483648
    %v617 = vor.u32 1.1754944e-38, %v616
    %v618 = vsel %vm615, %v617, %v613
    %v619 = vmul.f32 1.0, %v618
    %v620 = vtanh.pop %v600
    %v621 = vmul.f32 %v619, %v565
    %623 = vrot.lane.b32.xlu0 %v620, 64
    %v624 = vpop.permute.xlu0 %623
    %v626 = vmul.f32 %v619, %v624
    %628 = vrot.lane.b32.xlu0 %v626, 32
    %v629 = vpop.permute.xlu0 %628
    %v631 = vadd.f32 %v621, %v629
    %v632 = vtanh.pop %v631
    %634 = vrot.lane.b32.xlu0 %v632, 64
    %v635 = vpop.permute.xlu0 %634
    %v637 = vmul.f32 %v619, %v635
    %639 = vrot.lane.b32.xlu0 %v637, 32
    %v640 = vpop.permute.xlu0 %639
    %642 = vst.msk [vmem:[#allocation2 + $0xe] sm:$0x3] %vm179, %v640
    %v643 = vld [vmem:[#allocation2] sm:$0xff]
    %v644 = vld [vmem:[#allocation2 + $0x8] sm:$0xff]
    %v645 = vld [vmem:[#allocation4] sm:$0xff]
    %v646 = vld [vmem:[#allocation4 + $0x8] sm:$0xff]
    %v647 = vld [vmem:[#allocation4 + $0x10] sm:$0xff]
    %v648 = vld [vmem:[#allocation4 + $0x18] sm:$0xff]
    %v649 = vld [vmem:[%s6] sm:$0x1]
    %v651 = vperm.slane %v649, 0
    %v654 = vsel %vm113, %v643, 0
    %v657 = vsel %vm113, %v644, 0
    %659 = vmatpush.msra.mxu0 0.0
    %660 = vmatpush.msra.mxu0 0.0
    %661 = vmatpush.msra.mxu0 0.0
    %662 = vmatpush.msra.mxu0 0.0
    %663 = vmatpush.msra.mxu0 0.0
    %664 = vmatpush.msra.mxu0 0.0
    %665 = vmatpush.msra.mxu0 0.0
    %666 = vmatpush.msra.mxu0 0.0
    %667 = vmatpush.msra.mxu0 0.0
    %668 = vmatpush.msra.mxu0 0.0
    %669 = vmatpush.msra.mxu0 0.0
    %670 = vmatpush.msra.mxu0 0.0
    %671 = vmatpush.msra.mxu0 %v648
    %672 = vmatpush.msra.mxu0 %v647
    %673 = vmatpush.msra.mxu0 %v646
    %674 = vmatpush.msra.mxu0 %v645
    %675 = vmatmul.f32.gmra.mxu0 %v654
    %v676 = vpop.f32.mrf.mxu0
    %v677 = vadd.f32 %v651, %v676
    %678 = vmatmul.f32.gmra.mxu0 %v657
    %v679 = vpop.f32.mrf.mxu0
    %v680 = vadd.f32 %v651, %v679
    %681 = vdwg.mxu0
    %682 = vst [vmem:[#allocation3] sm:$0xff] %v677
    %683 = vst [vmem:[#allocation3 + $0x8] sm:$0xff] %v680
    %v684 = vld [vmem:[#allocation7] sm:$0xff]
    %v685 = vld [vmem:[#allocation7 + $0x8] sm:$0xff]
    %v686 = vld [vmem:[#allocation7 + $0x10] sm:$0xff]
    %v687 = vld [vmem:[#allocation7 + $0x18] sm:$0xff]
    %v688 = vld [vmem:[#allocation3] sm:$0x3]
    %689 = vmatpush.msra.mxu0 0.0
    %690 = vmatpush.msra.mxu0 0.0
    %691 = vmatpush.msra.mxu0 0.0
    %692 = vmatpush.msra.mxu0 0.0
    %693 = vmatpush.msra.mxu0 0.0
    %694 = vmatpush.msra.mxu0 0.0
    %695 = vmatpush.msra.mxu0 0.0
    %696 = vmatpush.msra.mxu0 0.0
    %697 = vmatpush.msra.mxu0 0.0
    %698 = vmatpush.msra.mxu0 0.0
    %699 = vmatpush.msra.mxu0 0.0
    %700 = vmatpush.msra.mxu0 0.0
    %701 = vmatpush.msra.mxu0 %v687
    %702 = vmatpush.msra.mxu0 %v686
    %703 = vmatpush.msra.mxu0 %v685
    %704 = vmatpush.msra.mxu0 %v684
    %705 = vmatmul.f32.gmra.mxu0 %v115
    %v706 = vpop.f32.mrf.mxu0
    %v707 = vadd.f32 0.0, %v706
    %708 = vdwg.mxu0
    %v709 = vadd.f32 %v688, %v707
    %v710 = vxor.u32 %v709, 2147483648
    %v711 = vmul.f32 %v710, 1.442695
    %v712 = vpow.pop %v711
    %v713 = vadd.f32 %v712, 1.0
    %v714 = vrcp.pop %v713
    %v715 = vmul.f32 %v713, %v714
    %v716 = vsub.f32 1.0, %v715
    %v717 = vmul.f32 %v714, %v716
    %v718 = vadd.f32 %v714, %v717
    %vm719 = vweird.f32 %v713
    %vm720 = vweird.f32 %v714
    %vm721 = vmor %vm719, %vm720
    %v722 = vsel %vm721, %v714, %v718
    %v723 = vand.u32 2147483647, %v713
    %vm724 = vcmp.eq.f32.partialorder %v723, 8.507059e+37
    %v725 = vand.u32 %v713, 2147483648
    %v726 = vor.u32 1.1754944e-38, %v725
    %v727 = vsel %vm724, %v726, %v722
    %v728 = vmul.f32 1.0, %v727
    %v729 = vtanh.pop %v709
    %v730 = vmul.f32 %v728, 0.0
    %732 = vrot.lane.b32.xlu0 %v729, 64
    %v733 = vpop.permute.xlu0 %732
    %v735 = vmul.f32 %v728, %v733
    %737 = vrot.lane.b32.xlu0 %v735, 32
    %v738 = vpop.permute.xlu0 %737
    %v740 = vadd.f32 %v730, %v738
    %v741 = vtanh.pop %v740
    %743 = vrot.lane.b32.xlu0 %v741, 64
    %v744 = vpop.permute.xlu0 %743
    %v746 = vmul.f32 %v728, %v744
    %v747 = vld [vmem:[#allocation3 + $0x2] sm:$0x3]
    %749 = vrot.lane.b32.xlu0 %v746, 32
    %v750 = vpop.permute.xlu0 %749
    %v751 = vsel %vm113, %v750, 0
    %753 = vmatpush.msra.mxu0 0.0
    %754 = vmatpush.msra.mxu0 0.0
    %755 = vmatpush.msra.mxu0 0.0
    %756 = vmatpush.msra.mxu0 0.0
    %757 = vmatpush.msra.mxu0 0.0
    %758 = vmatpush.msra.mxu0 0.0
    %759 = vmatpush.msra.mxu0 0.0
    %760 = vmatpush.msra.mxu0 0.0
    %761 = vmatpush.msra.mxu0 0.0
    %762 = vmatpush.msra.mxu0 0.0
    %763 = vmatpush.msra.mxu0 0.0
    %764 = vmatpush.msra.mxu0 0.0
    %765 = vmatpush.msra.mxu0 %v687
    %766 = vmatpush.msra.mxu0 %v686
    %767 = vmatpush.msra.mxu0 %v685
    %768 = vmatpush.msra.mxu0 %v684
    %769 = vmatmul.f32.gmra.mxu0 %v751
    %v770 = vpop.f32.mrf.mxu0
    %v771 = vadd.f32 0.0, %v770
    %772 = vdwg.mxu0
    %v773 = vadd.f32 %v747, %v771
    %v774 = vxor.u32 %v773, 2147483648
    %v775 = vmul.f32 %v774, 1.442695
    %v776 = vpow.pop %v775
    %v777 = vadd.f32 %v776, 1.0
    %v778 = vrcp.pop %v777
    %v779 = vmul.f32 %v777, %v778
    %v780 = vsub.f32 1.0, %v779
    %v781 = vmul.f32 %v778, %v780
    %v782 = vadd.f32 %v778, %v781
    %vm783 = vweird.f32 %v777
    %vm784 = vweird.f32 %v778
    %vm785 = vmor %vm783, %vm784
    %v786 = vsel %vm785, %v778, %v782
    %v787 = vand.u32 2147483647, %v777
    %vm788 = vcmp.eq.f32.partialorder %v787, 8.507059e+37
    %v789 = vand.u32 %v777, 2147483648
    %v790 = vor.u32 1.1754944e-38, %v789
    %v791 = vsel %vm788, %v790, %v786
    %v792 = vmul.f32 1.0, %v791
    %v793 = vtanh.pop %v773
    %v794 = vmul.f32 %v792, %v740
    %796 = vrot.lane.b32.xlu0 %v793, 64
    %v797 = vpop.permute.xlu0 %796
    %v799 = vmul.f32 %v792, %v797
    %801 = vrot.lane.b32.xlu0 %v799, 32
    %v802 = vpop.permute.xlu0 %801
    %v804 = vadd.f32 %v794, %v802
    %v805 = vtanh.pop %v804
    %807 = vrot.lane.b32.xlu0 %v805, 64
    %v808 = vpop.permute.xlu0 %807
    %v810 = vmul.f32 %v792, %v808
    %v811 = vld [vmem:[#allocation3 + $0x4] sm:$0x3]
    %813 = vrot.lane.b32.xlu0 %v810, 32
    %v814 = vpop.permute.xlu0 %813
    %v815 = vsel %vm113, %v814, 0
    %817 = vmatpush.msra.mxu0 0.0
    %818 = vmatpush.msra.mxu0 0.0
    %819 = vmatpush.msra.mxu0 0.0
    %820 = vmatpush.msra.mxu0 0.0
    %821 = vmatpush.msra.mxu0 0.0
    %822 = vmatpush.msra.mxu0 0.0
    %823 = vmatpush.msra.mxu0 0.0
    %824 = vmatpush.msra.mxu0 0.0
    %825 = vmatpush.msra.mxu0 0.0
    %826 = vmatpush.msra.mxu0 0.0
    %827 = vmatpush.msra.mxu0 0.0
    %828 = vmatpush.msra.mxu0 0.0
    %829 = vmatpush.msra.mxu0 %v687
    %830 = vmatpush.msra.mxu0 %v686
    %831 = vmatpush.msra.mxu0 %v685
    %832 = vmatpush.msra.mxu0 %v684
    %833 = vmatmul.f32.gmra.mxu0 %v815
    %v834 = vpop.f32.mrf.mxu0
    %v835 = vadd.f32 0.0, %v834
    %836 = vdwg.mxu0
    %v837 = vadd.f32 %v811, %v835
    %v838 = vxor.u32 %v837, 2147483648
    %v839 = vmul.f32 %v838, 1.442695
    %v840 = vpow.pop %v839
    %v841 = vadd.f32 %v840, 1.0
    %v842 = vrcp.pop %v841
    %v843 = vmul.f32 %v841, %v842
    %v844 = vsub.f32 1.0, %v843
    %v845 = vmul.f32 %v842, %v844
    %v846 = vadd.f32 %v842, %v845
    %vm847 = vweird.f32 %v841
    %vm848 = vweird.f32 %v842
    %vm849 = vmor %vm847, %vm848
    %v850 = vsel %vm849, %v842, %v846
    %v851 = vand.u32 2147483647, %v841
    %vm852 = vcmp.eq.f32.partialorder %v851, 8.507059e+37
    %v853 = vand.u32 %v841, 2147483648
    %v854 = vor.u32 1.1754944e-38, %v853
    %v855 = vsel %vm852, %v854, %v850
    %v856 = vmul.f32 1.0, %v855
    %v857 = vtanh.pop %v837
    %v858 = vmul.f32 %v856, %v804
    %860 = vrot.lane.b32.xlu0 %v857, 64
    %v861 = vpop.permute.xlu0 %860
    %v863 = vmul.f32 %v856, %v861
    %865 = vrot.lane.b32.xlu0 %v863, 32
    %v866 = vpop.permute.xlu0 %865
    %v868 = vadd.f32 %v858, %v866
    %v869 = vtanh.pop %v868
    %871 = vrot.lane.b32.xlu0 %v869, 64
    %v872 = vpop.permute.xlu0 %871
    %v874 = vmul.f32 %v856, %v872
    %v875 = vld [vmem:[#allocation3 + $0x6] sm:$0x3]
    %877 = vrot.lane.b32.xlu0 %v874, 32
    %v878 = vpop.permute.xlu0 %877
    %v879 = vsel %vm113, %v878, 0
    %881 = vmatpush.msra.mxu0 0.0
    %882 = vmatpush.msra.mxu0 0.0
    %883 = vmatpush.msra.mxu0 0.0
    %884 = vmatpush.msra.mxu0 0.0
    %885 = vmatpush.msra.mxu0 0.0
    %886 = vmatpush.msra.mxu0 0.0
    %887 = vmatpush.msra.mxu0 0.0
    %888 = vmatpush.msra.mxu0 0.0
    %889 = vmatpush.msra.mxu0 0.0
    %890 = vmatpush.msra.mxu0 0.0
    %891 = vmatpush.msra.mxu0 0.0
    %892 = vmatpush.msra.mxu0 0.0
    %893 = vmatpush.msra.mxu0 %v687
    %894 = vmatpush.msra.mxu0 %v686
    %895 = vmatpush.msra.mxu0 %v685
    %896 = vmatpush.msra.mxu0 %v684
    %897 = vmatmul.f32.gmra.mxu0 %v879
    %v898 = vpop.f32.mrf.mxu0
    %v899 = vadd.f32 0.0, %v898
    %900 = vdwg.mxu0
    %v901 = vadd.f32 %v875, %v899
    %v902 = vxor.u32 %v901, 2147483648
    %v903 = vmul.f32 %v902, 1.442695
    %v904 = vpow.pop %v903
    %v905 = vadd.f32 %v904, 1.0
    %v906 = vrcp.pop %v905
    %v907 = vmul.f32 %v905, %v906
    %v908 = vsub.f32 1.0, %v907
    %v909 = vmul.f32 %v906, %v908
    %v910 = vadd.f32 %v906, %v909
    %vm911 = vweird.f32 %v905
    %vm912 = vweird.f32 %v906
    %vm913 = vmor %vm911, %vm912
    %v914 = vsel %vm913, %v906, %v910
    %v915 = vand.u32 2147483647, %v905
    %vm916 = vcmp.eq.f32.partialorder %v915, 8.507059e+37
    %v917 = vand.u32 %v905, 2147483648
    %v918 = vor.u32 1.1754944e-38, %v917
    %v919 = vsel %vm916, %v918, %v914
    %v920 = vmul.f32 1.0, %v919
    %v921 = vtanh.pop %v901
    %v922 = vmul.f32 %v920, %v868
    %924 = vrot.lane.b32.xlu0 %v921, 64
    %v925 = vpop.permute.xlu0 %924
    %v927 = vmul.f32 %v920, %v925
    %929 = vrot.lane.b32.xlu0 %v927, 32
    %v930 = vpop.permute.xlu0 %929
    %v932 = vadd.f32 %v922, %v930
    %v933 = vtanh.pop %v932
    %935 = vrot.lane.b32.xlu0 %v933, 64
    %v936 = vpop.permute.xlu0 %935
    %v938 = vmul.f32 %v920, %v936
    %v939 = vld [vmem:[#allocation3 + $0x8] sm:$0x3]
    %941 = vrot.lane.b32.xlu0 %v938, 32
    %v942 = vpop.permute.xlu0 %941
    %v943 = vsel %vm113, %v942, 0
    %945 = vmatpush.msra.mxu0 0.0
    %946 = vmatpush.msra.mxu0 0.0
    %947 = vmatpush.msra.mxu0 0.0
    %948 = vmatpush.msra.mxu0 0.0
    %949 = vmatpush.msra.mxu0 0.0
    %950 = vmatpush.msra.mxu0 0.0
    %951 = vmatpush.msra.mxu0 0.0
    %952 = vmatpush.msra.mxu0 0.0
    %953 = vmatpush.msra.mxu0 0.0
    %954 = vmatpush.msra.mxu0 0.0
    %955 = vmatpush.msra.mxu0 0.0
    %956 = vmatpush.msra.mxu0 0.0
    %957 = vmatpush.msra.mxu0 %v687
    %958 = vmatpush.msra.mxu0 %v686
    %959 = vmatpush.msra.mxu0 %v685
    %960 = vmatpush.msra.mxu0 %v684
    %961 = vmatmul.f32.gmra.mxu0 %v943
    %v962 = vpop.f32.mrf.mxu0
    %v963 = vadd.f32 0.0, %v962
    %964 = vdwg.mxu0
    %v965 = vadd.f32 %v939, %v963
    %v966 = vxor.u32 %v965, 2147483648
    %v967 = vmul.f32 %v966, 1.442695
    %v968 = vpow.pop %v967
    %v969 = vadd.f32 %v968, 1.0
    %v970 = vrcp.pop %v969
    %v971 = vmul.f32 %v969, %v970
    %v972 = vsub.f32 1.0, %v971
    %v973 = vmul.f32 %v970, %v972
    %v974 = vadd.f32 %v970, %v973
    %vm975 = vweird.f32 %v969
    %vm976 = vweird.f32 %v970
    %vm977 = vmor %vm975, %vm976
    %v978 = vsel %vm977, %v970, %v974
    %v979 = vand.u32 2147483647, %v969
    %vm980 = vcmp.eq.f32.partialorder %v979, 8.507059e+37
    %v981 = vand.u32 %v969, 2147483648
    %v982 = vor.u32 1.1754944e-38, %v981
    %v983 = vsel %vm980, %v982, %v978
    %v984 = vmul.f32 1.0, %v983
    %v985 = vtanh.pop %v965
    %v986 = vmul.f32 %v984, %v932
    %988 = vrot.lane.b32.xlu0 %v985, 64
    %v989 = vpop.permute.xlu0 %988
    %v991 = vmul.f32 %v984, %v989
    %993 = vrot.lane.b32.xlu0 %v991, 32
    %v994 = vpop.permute.xlu0 %993
    %v996 = vadd.f32 %v986, %v994
    %v997 = vtanh.pop %v996
    %999 = vrot.lane.b32.xlu0 %v997, 64
    %v1000 = vpop.permute.xlu0 %999
    %v1002 = vmul.f32 %v984, %v1000
    %v1003 = vld [vmem:[#allocation3 + $0xa] sm:$0x3]
    %1005 = vrot.lane.b32.xlu0 %v1002, 32
    %v1006 = vpop.permute.xlu0 %1005
    %v1007 = vsel %vm113, %v1006, 0
    %1009 = vmatpush.msra.mxu0 0.0
    %1010 = vmatpush.msra.mxu0 0.0
    %1011 = vmatpush.msra.mxu0 0.0
    %1012 = vmatpush.msra.mxu0 0.0
    %1013 = vmatpush.msra.mxu0 0.0
    %1014 = vmatpush.msra.mxu0 0.0
    %1015 = vmatpush.msra.mxu0 0.0
    %1016 = vmatpush.msra.mxu0 0.0
    %1017 = vmatpush.msra.mxu0 0.0
    %1018 = vmatpush.msra.mxu0 0.0
    %1019 = vmatpush.msra.mxu0 0.0
    %1020 = vmatpush.msra.mxu0 0.0
    %1021 = vmatpush.msra.mxu0 %v687
    %1022 = vmatpush.msra.mxu0 %v686
    %1023 = vmatpush.msra.mxu0 %v685
    %1024 = vmatpush.msra.mxu0 %v684
    %1025 = vmatmul.f32.gmra.mxu0 %v1007
    %v1026 = vpop.f32.mrf.mxu0
    %v1027 = vadd.f32 0.0, %v1026
    %1028 = vdwg.mxu0
    %v1029 = vadd.f32 %v1003, %v1027
    %v1030 = vxor.u32 %v1029, 2147483648
    %v1031 = vmul.f32 %v1030, 1.442695
    %v1032 = vpow.pop %v1031
    %v1033 = vadd.f32 %v1032, 1.0
    %v1034 = vrcp.pop %v1033
    %v1035 = vmul.f32 %v1033, %v1034
    %v1036 = vsub.f32 1.0, %v1035
    %v1037 = vmul.f32 %v1034, %v1036
    %v1038 = vadd.f32 %v1034, %v1037
    %vm1039 = vweird.f32 %v1033
    %vm1040 = vweird.f32 %v1034
    %vm1041 = vmor %vm1039, %vm1040
    %v1042 = vsel %vm1041, %v1034, %v1038
    %v1043 = vand.u32 2147483647, %v1033
    %vm1044 = vcmp.eq.f32.partialorder %v1043, 8.507059e+37
    %v1045 = vand.u32 %v1033, 2147483648
    %v1046 = vor.u32 1.1754944e-38, %v1045
    %v1047 = vsel %vm1044, %v1046, %v1042
    %v1048 = vmul.f32 1.0, %v1047
    %v1049 = vtanh.pop %v1029
    %v1050 = vmul.f32 %v1048, %v996
    %1052 = vrot.lane.b32.xlu0 %v1049, 64
    %v1053 = vpop.permute.xlu0 %1052
    %v1055 = vmul.f32 %v1048, %v1053
    %1057 = vrot.lane.b32.xlu0 %v1055, 32
    %v1058 = vpop.permute.xlu0 %1057
    %v1060 = vadd.f32 %v1050, %v1058
    %v1061 = vtanh.pop %v1060
    %1063 = vrot.lane.b32.xlu0 %v1061, 64
    %v1064 = vpop.permute.xlu0 %1063
    %v1066 = vmul.f32 %v1048, %v1064
    %v1067 = vld [vmem:[#allocation3 + $0xc] sm:$0x3]
    %1069 = vrot.lane.b32.xlu0 %v1066, 32
    %v1070 = vpop.permute.xlu0 %1069
    %v1071 = vsel %vm113, %v1070, 0
    %1073 = vmatpush.msra.mxu0 0.0
    %1074 = vmatpush.msra.mxu0 0.0
    %1075 = vmatpush.msra.mxu0 0.0
    %1076 = vmatpush.msra.mxu0 0.0
    %1077 = vmatpush.msra.mxu0 0.0
    %1078 = vmatpush.msra.mxu0 0.0
    %1079 = vmatpush.msra.mxu0 0.0
    %1080 = vmatpush.msra.mxu0 0.0
    %1081 = vmatpush.msra.mxu0 0.0
    %1082 = vmatpush.msra.mxu0 0.0
    %1083 = vmatpush.msra.mxu0 0.0
    %1084 = vmatpush.msra.mxu0 0.0
    %1085 = vmatpush.msra.mxu0 %v687
    %1086 = vmatpush.msra.mxu0 %v686
    %1087 = vmatpush.msra.mxu0 %v685
    %1088 = vmatpush.msra.mxu0 %v684
    %1089 = vmatmul.f32.gmra.mxu0 %v1071
    %v1090 = vpop.f32.mrf.mxu0
    %v1091 = vadd.f32 0.0, %v1090
    %1092 = vdwg.mxu0
    %v1093 = vadd.f32 %v1067, %v1091
    %v1094 = vxor.u32 %v1093, 2147483648
    %v1095 = vmul.f32 %v1094, 1.442695
    %v1096 = vpow.pop %v1095
    %v1097 = vadd.f32 %v1096, 1.0
    %v1098 = vrcp.pop %v1097
    %v1099 = vmul.f32 %v1097, %v1098
    %v1100 = vsub.f32 1.0, %v1099
    %v1101 = vmul.f32 %v1098, %v1100
    %v1102 = vadd.f32 %v1098, %v1101
    %vm1103 = vweird.f32 %v1097
    %vm1104 = vweird.f32 %v1098
    %vm1105 = vmor %vm1103, %vm1104
    %v1106 = vsel %vm1105, %v1098, %v1102
    %v1107 = vand.u32 2147483647, %v1097
    %vm1108 = vcmp.eq.f32.partialorder %v1107, 8.507059e+37
    %v1109 = vand.u32 %v1097, 2147483648
    %v1110 = vor.u32 1.1754944e-38, %v1109
    %v1111 = vsel %vm1108, %v1110, %v1106
    %v1112 = vmul.f32 1.0, %v1111
    %v1113 = vtanh.pop %v1093
    %v1114 = vmul.f32 %v1112, %v1060
    %1116 = vrot.lane.b32.xlu0 %v1113, 64
    %v1117 = vpop.permute.xlu0 %1116
    %v1119 = vmul.f32 %v1112, %v1117
    %1121 = vrot.lane.b32.xlu0 %v1119, 32
    %v1122 = vpop.permute.xlu0 %1121
    %v1124 = vadd.f32 %v1114, %v1122
    %v1125 = vtanh.pop %v1124
    %1127 = vrot.lane.b32.xlu0 %v1125, 64
    %v1128 = vpop.permute.xlu0 %1127
    %v1130 = vmul.f32 %v1112, %v1128
    %v1131 = vld [vmem:[#allocation3 + $0xe] sm:$0x3]
    %1133 = vrot.lane.b32.xlu0 %v1130, 32
    %v1134 = vpop.permute.xlu0 %1133
    %v1135 = vsel %vm113, %v1134, 0
    %1137 = vmatpush.msra.mxu0 0.0
    %1138 = vmatpush.msra.mxu0 0.0
    %1139 = vmatpush.msra.mxu0 0.0
    %1140 = vmatpush.msra.mxu0 0.0
    %1141 = vmatpush.msra.mxu0 0.0
    %1142 = vmatpush.msra.mxu0 0.0
    %1143 = vmatpush.msra.mxu0 0.0
    %1144 = vmatpush.msra.mxu0 0.0
    %1145 = vmatpush.msra.mxu0 0.0
    %1146 = vmatpush.msra.mxu0 0.0
    %1147 = vmatpush.msra.mxu0 0.0
    %1148 = vmatpush.msra.mxu0 0.0
    %1149 = vmatpush.msra.mxu0 %v687
    %1150 = vmatpush.msra.mxu0 %v686
    %1151 = vmatpush.msra.mxu0 %v685
    %1152 = vmatpush.msra.mxu0 %v684
    %1153 = vmatmul.f32.gmra.mxu0 %v1135
    %v1154 = vpop.f32.mrf.mxu0
    %v1155 = vadd.f32 0.0, %v1154
    %1156 = vdwg.mxu0
    %v1157 = vadd.f32 %v1131, %v1155
    %v1158 = vxor.u32 %v1157, 2147483648
    %v1159 = vmul.f32 %v1158, 1.442695
    %v1160 = vpow.pop %v1159
    %v1161 = vadd.f32 %v1160, 1.0
    %v1162 = vrcp.pop %v1161
    %v1163 = vmul.f32 %v1161, %v1162
    %v1164 = vsub.f32 1.0, %v1163
    %v1165 = vmul.f32 %v1162, %v1164
    %v1166 = vadd.f32 %v1162, %v1165
    %vm1167 = vweird.f32 %v1161
    %vm1168 = vweird.f32 %v1162
    %vm1169 = vmor %vm1167, %vm1168
    %v1170 = vsel %vm1169, %v1162, %v1166
    %v1171 = vand.u32 2147483647, %v1161
    %vm1172 = vcmp.eq.f32.partialorder %v1171, 8.507059e+37
    %v1173 = vand.u32 %v1161, 2147483648
    %v1174 = vor.u32 1.1754944e-38, %v1173
    %v1175 = vsel %vm1172, %v1174, %v1170
    %v1176 = vmul.f32 1.0, %v1175
    %v1177 = vtanh.pop %v1157
    %v1178 = vmul.f32 %v1176, %v1124
    %1180 = vrot.lane.b32.xlu0 %v1177, 64
    %v1181 = vpop.permute.xlu0 %1180
    %v1183 = vmul.f32 %v1176, %v1181
    %1185 = vrot.lane.b32.xlu0 %v1183, 32
    %v1186 = vpop.permute.xlu0 %1185
    %v1188 = vadd.f32 %v1178, %v1186
    %v1189 = vtanh.pop %v1188
    %1191 = vrot.lane.b32.xlu0 %v1189, 64
    %v1192 = vpop.permute.xlu0 %1191
    %v1194 = vmul.f32 %v1176, %v1192
    %v1195 = vld [vmem:[%s7] sm:$0xff]
    %v1196 = vld [vmem:[%s7 + $0x8] sm:$0xff]
    %v1197 = vld [vmem:[%s7 + $0x10] sm:$0xff]
    %v1198 = vld [vmem:[%s7 + $0x18] sm:$0xff]
    %v1199 = vld [vmem:[%s8] sm:$0x1]
    %v1201 = vperm.slane %v1199, 0
    %1204 = vrot.lane.b32.xlu0 %v1194, 32
    %v1205 = vpop.permute.xlu0 %1204
    %v1206 = vsel %vm113, %v1205, 0
    %1208 = vmatpush.msra.mxu0 0.0
    %1209 = vmatpush.msra.mxu0 0.0
    %1210 = vmatpush.msra.mxu0 0.0
    %1211 = vmatpush.msra.mxu0 0.0
    %1212 = vmatpush.msra.mxu0 0.0
    %1213 = vmatpush.msra.mxu0 0.0
    %1214 = vmatpush.msra.mxu0 0.0
    %1215 = vmatpush.msra.mxu0 0.0
    %1216 = vmatpush.msra.mxu0 0.0
    %1217 = vmatpush.msra.mxu0 0.0
    %1218 = vmatpush.msra.mxu0 0.0
    %1219 = vmatpush.msra.mxu0 0.0
    %1220 = vmatpush.msra.mxu0 %v1198
    %1221 = vmatpush.msra.mxu0 %v1197
    %1222 = vmatpush.msra.mxu0 %v1196
    %1223 = vmatpush.msra.mxu0 %v1195
    %1224 = vmatmul.f32.gmra.mxu0 %v1206
    %v1225 = vpop.f32.mrf.mxu0
    %v1226 = vadd.f32 %v1201, %v1225
    %1227 = vdwg.mxu0
    %vm1228 = vcmask 25600
    %1229 = vst.msk [vmem:[#allocation9] sm:$0x3] %vm1228, %v1226
    // Predicated region
    $region46: #{lstm_model_forward.1} parent=1 // pred_check
      _
    $region47: #{lstm_model_forward.1} parent=1 // pred_check_branch
      %1231 = sbr.rel (0) target = $region49
    $region48: #{lstm_model_forward.1} parent=1 // pred_region
      %1233 = vsyncadd [#allocation6], 0
      %s1235 = sshll.u32 [#allocation9], 4
      %s1236 = int_to_ptr.vmem [resolvable:$true] %s1235
      %s1237 = sshll.u32 %s9, 4
      %s1238 = int_to_ptr.hbm [resolvable:$true] %s1237
      %1240 = dma.vmem_to_hbm [thread:$0]  %s1236, 32, %s1238, [#allocation6]
    $region49: #{lstm_model_forward.1} parent=1 // pred_fallthru
      _
    // Predicated region
    $region50: #{lstm_model_forward.1} parent=1 // pred_check
      _
    $region51: #{lstm_model_forward.1} parent=1 // pred_check_branch
      %1242 = sbr.rel (0) target = $region53
    $region52: #{lstm_model_forward.1} parent=1 // pred_region
      %1244 = dma.done [#allocation6], 32
    $region53: #{lstm_model_forward.1} parent=1 // pred_fallthru
      _
    %1245 = vsyncpa [#allocation5], 1
    %1246 = vsyncpa [#allocation8], 1
    %1247 = vsyncpa [#allocation6], 1

</llo_original>
